<compile_context>
chip_gen: v7x
topology: tpu7x:2x2x1
jax: 0.10.0
libtpu: 0.0.40
codegen_flags: <defaults>
</compile_context>

<pallas_src>
import functools

import jax
import jax.numpy as jnp
from jax.experimental import pallas as pl
from jax.experimental.pallas import tpu as pltpu

EPS = 1e-5
INV_SQRT2 = 0.7071067811865476


def _resblock_kernel(x_ref, u_ref, d_ref, b1_ref, b2_ref, br_ref, p_ref,
                     gamma_ref, beta_ref, out_ref, *, n_pix):
    """Fully fused residual block (single grid point, everything in VMEM).

    x_ref    : (R, W*Cin)          input, R = N*H pixel rows, lane = j*Cin + ci
    u_ref    : (R, R)              shift-up-one-row matrix (zero at image top)
    d_ref    : (R, R)              shift-down-one-row matrix (zero at image bottom)
    b1_ref   : (3, W*Cin,  W*Cout) conv1 banded weights, one per dh tap
    b2_ref   : (3, W*Cout, W*Cout) conv2 banded weights, one per dh tap
    br_ref   : (W*Cin, W*Cout)     residual 1x1 conv, block-diagonal
    p_ref    : (W*Cout, W*Cout)    same-channel projection (per-channel pooling)
    gamma_ref: (4, W*Cout)         per-lane BN scales  [bn1, bn2, bn_res, bn_out]
    beta_ref : (4, W*Cout)         per-lane BN biases
    out_ref  : (R, W*Cout)         lane-dense output (W*Cout == 128 here)
    n_pix    : static N*H*W — element count per channel for BN statistics
    """
    x = x_ref[...]
    shift_up = u_ref[...]
    shift_dn = d_ref[...]
    proj = p_ref[...]
    inv_n = 1.0 / n_pix

    def dot(a, b):
        return jnp.dot(a, b, preferred_element_type=jnp.float32)

    def conv3x3(t, b_ref):
        # dh taps: row-shifted copies (the shift matrices already encode the
        # zero row-padding at image boundaries).  dw taps + zero column
        # padding are folded into the banded weight matrices.
        t_up = dot(shift_up, t)     # row i-1  (zero where i == 0)
        t_dn = dot(shift_dn, t)     # row i+1  (zero where i == H-1)
        return dot(t_up, b_ref[0]) + dot(t, b_ref[1]) + dot(t_dn, b_ref[2])

    def bn(t, idx):
        # One-pass folded training-mode BatchNorm (biased variance):
        # stats = sum / sum-of-squares, then a single scale/shift per element.
        col_sum = jnp.sum(t, axis=0, keepdims=True)         # (1, W*C)
        col_sq = jnp.sum(t * t, axis=0, keepdims=True)      # (1, W*C)
        mean = dot(col_sum, proj) * inv_n                   # per-channel, broadcast per lane
        ex2 = dot(col_sq, proj) * inv_n
        var = jnp.maximum(ex2 - mean * mean, 0.0)
        scale = gamma_ref[idx:idx + 1, :] * jax.lax.rsqrt(var + EPS)
        shift = beta_ref[idx:idx + 1, :] - mean * scale
        return t * scale + shift                            # 1 mul + 1 add / elem

    def gelu(t):
        # exact (erf) GELU, matching nn.GELU() default
        return 0.5 * t * (1.0 + jax.lax.erf(t * INV_SQRT2))

    y1 = gelu(bn(conv3x3(x, b1_ref), 0))
    y2 = gelu(bn(conv3x3(y1, b2_ref), 1))
    res = bn(dot(x, br_ref[...]), 2)
    out_ref[...] = bn(y2 + res, 3)


# ----------------------- wrapper-side weight packing ------------------------
def _build_banded(w_hwio, W):
    """(3,3,Ci,Co) HWIO conv weights -> 3 banded (W*Ci, W*Co) matrices.

    B[dh][j_in*Ci+ci, j_out*Co+co] = w[dh, j_in - j_out + 1, ci, co]
    when j_in - j_out + 1 in {0,1,2}; zero otherwise (this also realizes the
    'same' zero padding along the W axis).
    """
    kh, kw, ci, co = w_hwio.shape
    j_in = jnp.arange(W)
    j_out = jnp.arange(W)
    delta = j_in[:, None] - j_out[None, :] + 1                  # (W_in, W_out)
    valid = (delta >= 0) & (delta < kw)
    b = w_hwio[:, jnp.clip(delta, 0, kw - 1), :, :]             # (kh, Win, Wout, Ci, Co)
    b = jnp.where(valid[None, :, :, None, None], b, 0.0)
    b = jnp.transpose(b, (0, 1, 3, 2, 4))                       # (kh, Win, Ci, Wout, Co)
    return b.reshape(kh, W * ci, W * co)


def _build_blockdiag(wr, W):
    """1x1 conv weights (Ci, Co) -> block-diagonal (W*Ci, W*Co)."""
    ci, co = wr.shape
    eye = jnp.eye(W, dtype=wr.dtype)
    b = eye[:, None, :, None] * wr[None, :, None, :]            # (W, Ci, W, Co)
    return b.reshape(W * ci, W * co)


def _build_row_shifts(N, H):
    """(R,R) shift matrices: row above / row below within the same image."""
    R = N * H
    r = jnp.arange(R)
    up = ((r[:, None] - 1) == r[None, :]) & ((r % H) != 0)[:, None]
    dn = ((r[:, None] + 1) == r[None, :]) & ((r % H) != (H - 1))[:, None]
    return up.astype(jnp.float32), dn.astype(jnp.float32)


def residual_block3_pallas(x_nhwc, params):
    N, H, W, Cin = x_nhwc.shape
    Cout = params["w1"].shape[-1]
    R = N * H

    # Lane-dense packing: (N*H, W*Cin) input, (N*H, W*Cout) output (=128 lanes).
    x_packed = x_nhwc.astype(jnp.float32).reshape(R, W * Cin)

    shift_up, shift_dn = _build_row_shifts(N, H)
    b1 = _build_banded(params["w1"].astype(jnp.float32), W)     # (3, W*Cin,  W*Cout)
    b2 = _build_banded(params["w2"].astype(jnp.float32), W)     # (3, W*Cout, W*Cout)
    br = _build_blockdiag(params["wr"].astype(jnp.float32), W)  # (W*Cin, W*Cout)

    # Same-channel projection: P[l, l'] = 1 iff l % Cout == l' % Cout.
    lane = jnp.arange(W * Cout)
    proj = (lane[:, None] % Cout == lane[None, :] % Cout).astype(jnp.float32)

    # Per-lane (tiled) BN affine parameters: rows = [bn1, bn2, bn_res, bn_out].
    gamma = jnp.tile(jnp.stack([params["g1"], params["g2"],
                                params["gr"], params["go"]]), (1, W))
    beta = jnp.tile(jnp.stack([params["b1"], params["b2"],
                               params["br"], params["bo"]]), (1, W))

    vmem = pl.BlockSpec(memory_space=pltpu.MemorySpace.VMEM)
    kernel = functools.partial(_resblock_kernel, n_pix=N * H * W)
    out_packed = pl.pallas_call(
        kernel,
        out_shape=jax.ShapeDtypeStruct((R, W * Cout), jnp.float32),
        in_specs=[vmem] * 9,
        out_specs=vmem,
    )(x_packed, shift_up, shift_dn, b1, b2, br, proj, gamma, beta)

    return out_packed.reshape(N, H, W, Cout)


# ---------------- pure-JAX reference (for verification only) ----------------
def _ref_block(x_nhwc, p):
    def conv(x, w):
        return jax.lax.conv_general_dilated(
            x, w, window_strides=(1, 1), padding="SAME",
            dimension_numbers=("NHWC", "HWIO", "NHWC"))

    def bn(t, g, b):
        mean = t.mean(axis=(0, 1, 2), keepdims=True)
        var = ((t - mean) ** 2).mean(axis=(0, 1, 2), keepdims=True)
        return (t - mean) * jax.lax.rsqrt(var + EPS) * g + b

    def gelu(t):
        return 0.5 * t * (1.0 + jax.lax.erf(t * INV_SQRT2))

    y1 = gelu(bn(conv(x_nhwc, p["w1"]), p["g1"], p["b1"]))
    y2 = gelu(bn(conv(y1, p["w2"]), p["g2"], p["b2"]))
    res = bn(conv(x_nhwc, p["wr"][None, None, :, :]), p["gr"], p["br"])
    return bn(y2 + res, p["go"], p["bo"])


if __name__ == "__main__":
    key = jax.random.PRNGKey(0)
    N, Cin, Hh, Ww, Cout = 2, 4, 16, 16, 8
    ks = jax.random.split(key, 12)

    # Input in PyTorch's NCHW convention, then moved to NHWC for the kernel.
    x_nchw = jax.random.normal(ks[0], (N, Cin, Hh, Ww), jnp.float32)
    x_nhwc = jnp.transpose(x_nchw, (0, 2, 3, 1))

    # Deterministic synthetic parameters (conv weights in HWIO layout).
    params = {
        "w1": 0.2 * jax.random.normal(ks[1], (3, 3, Cin, Cout), jnp.float32),
        "w2": 0.2 * jax.random.normal(ks[2], (3, 3, Cout, Cout), jnp.float32),
        "wr": 0.2 * jax.random.normal(ks[3], (Cin, Cout), jnp.float32),
        "g1": 1.0 + 0.1 * jax.random.normal(ks[4], (Cout,), jnp.float32),
        "b1": 0.05 * jax.random.normal(ks[5], (Cout,), jnp.float32),
        "g2": 1.0 + 0.1 * jax.random.normal(ks[6], (Cout,), jnp.float32),
        "b2": 0.05 * jax.random.normal(ks[7], (Cout,), jnp.float32),
        "gr": 1.0 + 0.1 * jax.random.normal(ks[8], (Cout,), jnp.float32),
        "br": 0.05 * jax.random.normal(ks[9], (Cout,), jnp.float32),
        "go": 1.0 + 0.1 * jax.random.normal(ks[10], (Cout,), jnp.float32),
        "bo": 0.05 * jax.random.normal(ks[11], (Cout,), jnp.float32),
    }

    out = residual_block3_pallas(x_nhwc, params)
    out = jax.block_until_ready(out)

    ref = jax.block_until_ready(_ref_block(x_nhwc, params))
    if not jnp.allclose(out, ref, atol=1e-3, rtol=1e-3):
        raise AssertionError("Pallas output mismatch vs JAX reference")

    print("KERNEL_OK")
</pallas_src>

<mosaic_0001>
module attributes {stable_mosaic.version = 11 : i64} {
  func.func @_resblock_kernel(%arg0: memref<32x64xf32, #tpu.memory_space<vmem>>, %arg1: memref<32x32xf32, #tpu.memory_space<vmem>>, %arg2: memref<32x32xf32, #tpu.memory_space<vmem>>, %arg3: memref<3x64x128xf32, #tpu.memory_space<vmem>>, %arg4: memref<3x128x128xf32, #tpu.memory_space<vmem>>, %arg5: memref<64x128xf32, #tpu.memory_space<vmem>>, %arg6: memref<128x128xf32, #tpu.memory_space<vmem>>, %arg7: memref<4x128xf32, #tpu.memory_space<vmem>>, %arg8: memref<4x128xf32, #tpu.memory_space<vmem>>, %arg9: memref<32x128xf32, #tpu.memory_space<vmem>>) attributes {dimension_semantics = [], scalar_prefetch = 0 : i64, scratch_operands = 0 : i64, tpu.core_type = #tpu.core_type<tc>} {
    %c0 = arith.constant 0 : index
    %c0_0 = arith.constant 0 : index
    %0 = vector.load %arg0[%c0, %c0_0] : memref<32x64xf32, #tpu.memory_space<vmem>>, vector<32x64xf32>
    %c0_1 = arith.constant 0 : index
    %c0_2 = arith.constant 0 : index
    %1 = vector.load %arg1[%c0_1, %c0_2] : memref<32x32xf32, #tpu.memory_space<vmem>>, vector<32x32xf32>
    %c0_3 = arith.constant 0 : index
    %c0_4 = arith.constant 0 : index
    %2 = vector.load %arg2[%c0_3, %c0_4] : memref<32x32xf32, #tpu.memory_space<vmem>>, vector<32x32xf32>
    %c0_5 = arith.constant 0 : index
    %c0_6 = arith.constant 0 : index
    %3 = vector.load %arg6[%c0_5, %c0_6] : memref<128x128xf32, #tpu.memory_space<vmem>>, vector<128x128xf32>
    %cst = arith.constant dense<0.000000e+00> : vector<32x64xf32>
    %4 = tpu.matmul %1, %0, %cst {dimension_numbers = #tpu.dot_dimension_numbers<[1], [0], [0], [1], [0, 0, 1, 1], [], []>} : vector<32x32xf32>, vector<32x64xf32>, vector<32x64xf32> -> vector<32x64xf32>
    %cst_7 = arith.constant dense<0.000000e+00> : vector<32x64xf32>
    %5 = tpu.matmul %2, %0, %cst_7 {dimension_numbers = #tpu.dot_dimension_numbers<[1], [0], [0], [1], [0, 0, 1, 1], [], []>} : vector<32x32xf32>, vector<32x64xf32>, vector<32x64xf32> -> vector<32x64xf32>
    %c0_8 = arith.constant 0 : index
    %c0_9 = arith.constant 0 : index
    %c0_10 = arith.constant 0 : index
    %6 = vector.load %arg3[%c0_8, %c0_9, %c0_10] : memref<3x64x128xf32, #tpu.memory_space<vmem>>, vector<1x64x128xf32>
    %7 = vector.shape_cast %6 : vector<1x64x128xf32> to vector<64x128xf32>
    %cst_11 = arith.constant dense<0.000000e+00> : vector<32x128xf32>
    %8 = tpu.matmul %4, %7, %cst_11 {dimension_numbers = #tpu.dot_dimension_numbers<[1], [0], [0], [1], [0, 0, 1, 1], [], []>} : vector<32x64xf32>, vector<64x128xf32>, vector<32x128xf32> -> vector<32x128xf32>
    %c1 = arith.constant 1 : index
    %c0_12 = arith.constant 0 : index
    %c0_13 = arith.constant 0 : index
    %9 = vector.load %arg3[%c1, %c0_12, %c0_13] : memref<3x64x128xf32, #tpu.memory_space<vmem>>, vector<1x64x128xf32>
    %10 = vector.shape_cast %9 : vector<1x64x128xf32> to vector<64x128xf32>
    %cst_14 = arith.constant dense<0.000000e+00> : vector<32x128xf32>
    %11 = tpu.matmul %0, %10, %cst_14 {dimension_numbers = #tpu.dot_dimension_numbers<[1], [0], [0], [1], [0, 0, 1, 1], [], []>} : vector<32x64xf32>, vector<64x128xf32>, vector<32x128xf32> -> vector<32x128xf32>
    %12 = arith.addf %8, %11 : vector<32x128xf32>
    %c2 = arith.constant 2 : index
    %c0_15 = arith.constant 0 : index
    %c0_16 = arith.constant 0 : index
    %13 = vector.load %arg3[%c2, %c0_15, %c0_16] : memref<3x64x128xf32, #tpu.memory_space<vmem>>, vector<1x64x128xf32>
    %14 = vector.shape_cast %13 : vector<1x64x128xf32> to vector<64x128xf32>
    %cst_17 = arith.constant dense<0.000000e+00> : vector<32x128xf32>
    %15 = tpu.matmul %5, %14, %cst_17 {dimension_numbers = #tpu.dot_dimension_numbers<[1], [0], [0], [1], [0, 0, 1, 1], [], []>} : vector<32x64xf32>, vector<64x128xf32>, vector<32x128xf32> -> vector<32x128xf32>
    %16 = arith.addf %12, %15 : vector<32x128xf32>
    %cst_18 = arith.constant dense<0.000000e+00> : vector<128xf32>
    %17 = vector.multi_reduction <add>, %16, %cst_18 [0] : vector<32x128xf32> to vector<128xf32>
    %18 = vector.shape_cast %17 : vector<128xf32> to vector<1x128xf32>
    %19 = arith.mulf %16, %16 : vector<32x128xf32>
    %cst_19 = arith.constant dense<0.000000e+00> : vector<128xf32>
    %20 = vector.multi_reduction <add>, %19, %cst_19 [0] : vector<32x128xf32> to vector<128xf32>
    %21 = vector.shape_cast %20 : vector<128xf32> to vector<1x128xf32>
    %cst_20 = arith.constant dense<0.000000e+00> : vector<1x128xf32>
    %22 = tpu.matmul %18, %3, %cst_20 {dimension_numbers = #tpu.dot_dimension_numbers<[1], [0], [0], [1], [0, 0, 1, 1], [], []>} : vector<1x128xf32>, vector<128x128xf32>, vector<1x128xf32> -> vector<1x128xf32>
    %cst_21 = arith.constant 0.001953125 : f32
    %23 = vector.broadcast %cst_21 : f32 to vector<1x128xf32>
    %24 = arith.mulf %22, %23 : vector<1x128xf32>
    %cst_22 = arith.constant dense<0.000000e+00> : vector<1x128xf32>
    %25 = tpu.matmul %21, %3, %cst_22 {dimension_numbers = #tpu.dot_dimension_numbers<[1], [0], [0], [1], [0, 0, 1, 1], [], []>} : vector<1x128xf32>, vector<128x128xf32>, vector<1x128xf32> -> vector<1x128xf32>
    %cst_23 = arith.constant 0.001953125 : f32
    %26 = vector.broadcast %cst_23 : f32 to vector<1x128xf32>
    %27 = arith.mulf %25, %26 : vector<1x128xf32>
    %28 = arith.mulf %24, %24 : vector<1x128xf32>
    %29 = arith.subf %27, %28 : vector<1x128xf32>
    %cst_24 = arith.constant 0.000000e+00 : f32
    %30 = vector.broadcast %cst_24 : f32 to vector<1x128xf32>
    %31 = arith.maximumf %29, %30 : vector<1x128xf32>
    %c0_25 = arith.constant 0 : index
    %c0_26 = arith.constant 0 : index
    %32 = vector.load %arg7[%c0_25, %c0_26] : memref<4x128xf32, #tpu.memory_space<vmem>>, vector<1x128xf32>
    %cst_27 = arith.constant 9.99999974E-6 : f32
    %33 = vector.broadcast %cst_27 : f32 to vector<1x128xf32>
    %34 = arith.addf %31, %33 : vector<1x128xf32>
    %35 = math.rsqrt %34 : vector<1x128xf32>
    %36 = arith.mulf %32, %35 : vector<1x128xf32>
    %c0_28 = arith.constant 0 : index
    %c0_29 = arith.constant 0 : index
    %37 = vector.load %arg8[%c0_28, %c0_29] : memref<4x128xf32, #tpu.memory_space<vmem>>, vector<1x128xf32>
    %38 = arith.mulf %24, %36 : vector<1x128xf32>
    %39 = arith.subf %37, %38 : vector<1x128xf32>
    %40 = vector.broadcast %36 : vector<1x128xf32> to vector<32x128xf32>
    %41 = arith.mulf %16, %40 : vector<32x128xf32>
    %42 = vector.broadcast %39 : vector<1x128xf32> to vector<32x128xf32>
    %43 = arith.addf %41, %42 : vector<32x128xf32>
    %cst_30 = arith.constant 5.000000e-01 : f32
    %44 = vector.broadcast %cst_30 : f32 to vector<32x128xf32>
    %45 = arith.mulf %44, %43 : vector<32x128xf32>
    %cst_31 = arith.constant 0.707106769 : f32
    %46 = vector.broadcast %cst_31 : f32 to vector<32x128xf32>
    %47 = arith.mulf %43, %46 : vector<32x128xf32>
    %48 = math.erf %47 : vector<32x128xf32>
    %cst_32 = arith.constant 1.000000e+00 : f32
    %49 = vector.broadcast %cst_32 : f32 to vector<32x128xf32>
    %50 = arith.addf %49, %48 : vector<32x128xf32>
    %51 = arith.mulf %45, %50 : vector<32x128xf32>
    %cst_33 = arith.constant dense<0.000000e+00> : vector<32x128xf32>
    %52 = tpu.matmul %1, %51, %cst_33 {dimension_numbers = #tpu.dot_dimension_numbers<[1], [0], [0], [1], [0, 0, 1, 1], [], []>} : vector<32x32xf32>, vector<32x128xf32>, vector<32x128xf32> -> vector<32x128xf32>
    %cst_34 = arith.constant dense<0.000000e+00> : vector<32x128xf32>
    %53 = tpu.matmul %2, %51, %cst_34 {dimension_numbers = #tpu.dot_dimension_numbers<[1], [0], [0], [1], [0, 0, 1, 1], [], []>} : vector<32x32xf32>, vector<32x128xf32>, vector<32x128xf32> -> vector<32x128xf32>
    %c0_35 = arith.constant 0 : index
    %c0_36 = arith.constant 0 : index
    %c0_37 = arith.constant 0 : index
    %54 = vector.load %arg4[%c0_35, %c0_36, %c0_37] : memref<3x128x128xf32, #tpu.memory_space<vmem>>, vector<1x128x128xf32>
    %55 = vector.shape_cast %54 : vector<1x128x128xf32> to vector<128x128xf32>
    %cst_38 = arith.constant dense<0.000000e+00> : vector<32x128xf32>
    %56 = tpu.matmul %52, %55, %cst_38 {dimension_numbers = #tpu.dot_dimension_numbers<[1], [0], [0], [1], [0, 0, 1, 1], [], []>} : vector<32x128xf32>, vector<128x128xf32>, vector<32x128xf32> -> vector<32x128xf32>
    %c1_39 = arith.constant 1 : index
    %c0_40 = arith.constant 0 : index
    %c0_41 = arith.constant 0 : index
    %57 = vector.load %arg4[%c1_39, %c0_40, %c0_41] : memref<3x128x128xf32, #tpu.memory_space<vmem>>, vector<1x128x128xf32>
    %58 = vector.shape_cast %57 : vector<1x128x128xf32> to vector<128x128xf32>
    %cst_42 = arith.constant dense<0.000000e+00> : vector<32x128xf32>
    %59 = tpu.matmul %51, %58, %cst_42 {dimension_numbers = #tpu.dot_dimension_numbers<[1], [0], [0], [1], [0, 0, 1, 1], [], []>} : vector<32x128xf32>, vector<128x128xf32>, vector<32x128xf32> -> vector<32x128xf32>
    %60 = arith.addf %56, %59 : vector<32x128xf32>
    %c2_43 = arith.constant 2 : index
    %c0_44 = arith.constant 0 : index
    %c0_45 = arith.constant 0 : index
    %61 = vector.load %arg4[%c2_43, %c0_44, %c0_45] : memref<3x128x128xf32, #tpu.memory_space<vmem>>, vector<1x128x128xf32>
    %62 = vector.shape_cast %61 : vector<1x128x128xf32> to vector<128x128xf32>
    %cst_46 = arith.constant dense<0.000000e+00> : vector<32x128xf32>
    %63 = tpu.matmul %53, %62, %cst_46 {dimension_numbers = #tpu.dot_dimension_numbers<[1], [0], [0], [1], [0, 0, 1, 1], [], []>} : vector<32x128xf32>, vector<128x128xf32>, vector<32x128xf32> -> vector<32x128xf32>
    %64 = arith.addf %60, %63 : vector<32x128xf32>
    %cst_47 = arith.constant dense<0.000000e+00> : vector<128xf32>
    %65 = vector.multi_reduction <add>, %64, %cst_47 [0] : vector<32x128xf32> to vector<128xf32>
    %66 = vector.shape_cast %65 : vector<128xf32> to vector<1x128xf32>
    %67 = arith.mulf %64, %64 : vector<32x128xf32>
    %cst_48 = arith.constant dense<0.000000e+00> : vector<128xf32>
    %68 = vector.multi_reduction <add>, %67, %cst_48 [0] : vector<32x128xf32> to vector<128xf32>
    %69 = vector.shape_cast %68 : vector<128xf32> to vector<1x128xf32>
    %cst_49 = arith.constant dense<0.000000e+00> : vector<1x128xf32>
    %70 = tpu.matmul %66, %3, %cst_49 {dimension_numbers = #tpu.dot_dimension_numbers<[1], [0], [0], [1], [0, 0, 1, 1], [], []>} : vector<1x128xf32>, vector<128x128xf32>, vector<1x128xf32> -> vector<1x128xf32>
    %cst_50 = arith.constant 0.001953125 : f32
    %71 = vector.broadcast %cst_50 : f32 to vector<1x128xf32>
    %72 = arith.mulf %70, %71 : vector<1x128xf32>
    %cst_51 = arith.constant dense<0.000000e+00> : vector<1x128xf32>
    %73 = tpu.matmul %69, %3, %cst_51 {dimension_numbers = #tpu.dot_dimension_numbers<[1], [0], [0], [1], [0, 0, 1, 1], [], []>} : vector<1x128xf32>, vector<128x128xf32>, vector<1x128xf32> -> vector<1x128xf32>
    %cst_52 = arith.constant 0.001953125 : f32
    %74 = vector.broadcast %cst_52 : f32 to vector<1x128xf32>
    %75 = arith.mulf %73, %74 : vector<1x128xf32>
    %76 = arith.mulf %72, %72 : vector<1x128xf32>
    %77 = arith.subf %75, %76 : vector<1x128xf32>
    %cst_53 = arith.constant 0.000000e+00 : f32
    %78 = vector.broadcast %cst_53 : f32 to vector<1x128xf32>
    %79 = arith.maximumf %77, %78 : vector<1x128xf32>
    %c1_54 = arith.constant 1 : index
    %c0_55 = arith.constant 0 : index
    %80 = vector.load %arg7[%c1_54, %c0_55] : memref<4x128xf32, #tpu.memory_space<vmem>>, vector<1x128xf32>
    %cst_56 = arith.constant 9.99999974E-6 : f32
    %81 = vector.broadcast %cst_56 : f32 to vector<1x128xf32>
    %82 = arith.addf %79, %81 : vector<1x128xf32>
    %83 = math.rsqrt %82 : vector<1x128xf32>
    %84 = arith.mulf %80, %83 : vector<1x128xf32>
    %c1_57 = arith.constant 1 : index
    %c0_58 = arith.constant 0 : index
    %85 = vector.load %arg8[%c1_57, %c0_58] : memref<4x128xf32, #tpu.memory_space<vmem>>, vector<1x128xf32>
    %86 = arith.mulf %72, %84 : vector<1x128xf32>
    %87 = arith.subf %85, %86 : vector<1x128xf32>
    %88 = vector.broadcast %84 : vector<1x128xf32> to vector<32x128xf32>
    %89 = arith.mulf %64, %88 : vector<32x128xf32>
    %90 = vector.broadcast %87 : vector<1x128xf32> to vector<32x128xf32>
    %91 = arith.addf %89, %90 : vector<32x128xf32>
    %cst_59 = arith.constant 5.000000e-01 : f32
    %92 = vector.broadcast %cst_59 : f32 to vector<32x128xf32>
    %93 = arith.mulf %92, %91 : vector<32x128xf32>
    %cst_60 = arith.constant 0.707106769 : f32
    %94 = vector.broadcast %cst_60 : f32 to vector<32x128xf32>
    %95 = arith.mulf %91, %94 : vector<32x128xf32>
    %96 = math.erf %95 : vector<32x128xf32>
    %cst_61 = arith.constant 1.000000e+00 : f32
    %97 = vector.broadcast %cst_61 : f32 to vector<32x128xf32>
    %98 = arith.addf %97, %96 : vector<32x128xf32>
    %99 = arith.mulf %93, %98 : vector<32x128xf32>
    %c0_62 = arith.constant 0 : index
    %c0_63 = arith.constant 0 : index
    %100 = vector.load %arg5[%c0_62, %c0_63] : memref<64x128xf32, #tpu.memory_space<vmem>>, vector<64x128xf32>
    %cst_64 = arith.constant dense<0.000000e+00> : vector<32x128xf32>
    %101 = tpu.matmul %0, %100, %cst_64 {dimension_numbers = #tpu.dot_dimension_numbers<[1], [0], [0], [1], [0, 0, 1, 1], [], []>} : vector<32x64xf32>, vector<64x128xf32>, vector<32x128xf32> -> vector<32x128xf32>
    %cst_65 = arith.constant dense<0.000000e+00> : vector<128xf32>
    %102 = vector.multi_reduction <add>, %101, %cst_65 [0] : vector<32x128xf32> to vector<128xf32>
    %103 = vector.shape_cast %102 : vector<128xf32> to vector<1x128xf32>
    %104 = arith.mulf %101, %101 : vector<32x128xf32>
    %cst_66 = arith.constant dense<0.000000e+00> : vector<128xf32>
    %105 = vector.multi_reduction <add>, %104, %cst_66 [0] : vector<32x128xf32> to vector<128xf32>
    %106 = vector.shape_cast %105 : vector<128xf32> to vector<1x128xf32>
    %cst_67 = arith.constant dense<0.000000e+00> : vector<1x128xf32>
    %107 = tpu.matmul %103, %3, %cst_67 {dimension_numbers = #tpu.dot_dimension_numbers<[1], [0], [0], [1], [0, 0, 1, 1], [], []>} : vector<1x128xf32>, vector<128x128xf32>, vector<1x128xf32> -> vector<1x128xf32>
    %cst_68 = arith.constant 0.001953125 : f32
    %108 = vector.broadcast %cst_68 : f32 to vector<1x128xf32>
    %109 = arith.mulf %107, %108 : vector<1x128xf32>
    %cst_69 = arith.constant dense<0.000000e+00> : vector<1x128xf32>
    %110 = tpu.matmul %106, %3, %cst_69 {dimension_numbers = #tpu.dot_dimension_numbers<[1], [0], [0], [1], [0, 0, 1, 1], [], []>} : vector<1x128xf32>, vector<128x128xf32>, vector<1x128xf32> -> vector<1x128xf32>
    %cst_70 = arith.constant 0.001953125 : f32
    %111 = vector.broadcast %cst_70 : f32 to vector<1x128xf32>
    %112 = arith.mulf %110, %111 : vector<1x128xf32>
    %113 = arith.mulf %109, %109 : vector<1x128xf32>
    %114 = arith.subf %112, %113 : vector<1x128xf32>
    %cst_71 = arith.constant 0.000000e+00 : f32
    %115 = vector.broadcast %cst_71 : f32 to vector<1x128xf32>
    %116 = arith.maximumf %114, %115 : vector<1x128xf32>
    %c2_72 = arith.constant 2 : index
    %c0_73 = arith.constant 0 : index
    %117 = vector.load %arg7[%c2_72, %c0_73] : memref<4x128xf32, #tpu.memory_space<vmem>>, vector<1x128xf32>
    %cst_74 = arith.constant 9.99999974E-6 : f32
    %118 = vector.broadcast %cst_74 : f32 to vector<1x128xf32>
    %119 = arith.addf %116, %118 : vector<1x128xf32>
    %120 = math.rsqrt %119 : vector<1x128xf32>
    %121 = arith.mulf %117, %120 : vector<1x128xf32>
    %c2_75 = arith.constant 2 : index
    %c0_76 = arith.constant 0 : index
    %122 = vector.load %arg8[%c2_75, %c0_76] : memref<4x128xf32, #tpu.memory_space<vmem>>, vector<1x128xf32>
    %123 = arith.mulf %109, %121 : vector<1x128xf32>
    %124 = arith.subf %122, %123 : vector<1x128xf32>
    %125 = vector.broadcast %121 : vector<1x128xf32> to vector<32x128xf32>
    %126 = arith.mulf %101, %125 : vector<32x128xf32>
    %127 = vector.broadcast %124 : vector<1x128xf32> to vector<32x128xf32>
    %128 = arith.addf %126, %127 : vector<32x128xf32>
    %129 = arith.addf %99, %128 : vector<32x128xf32>
    %cst_77 = arith.constant dense<0.000000e+00> : vector<128xf32>
    %130 = vector.multi_reduction <add>, %129, %cst_77 [0] : vector<32x128xf32> to vector<128xf32>
    %131 = vector.shape_cast %130 : vector<128xf32> to vector<1x128xf32>
    %132 = arith.mulf %129, %129 : vector<32x128xf32>
    %cst_78 = arith.constant dense<0.000000e+00> : vector<128xf32>
    %133 = vector.multi_reduction <add>, %132, %cst_78 [0] : vector<32x128xf32> to vector<128xf32>
    %134 = vector.shape_cast %133 : vector<128xf32> to vector<1x128xf32>
    %cst_79 = arith.constant dense<0.000000e+00> : vector<1x128xf32>
    %135 = tpu.matmul %131, %3, %cst_79 {dimension_numbers = #tpu.dot_dimension_numbers<[1], [0], [0], [1], [0, 0, 1, 1], [], []>} : vector<1x128xf32>, vector<128x128xf32>, vector<1x128xf32> -> vector<1x128xf32>
    %cst_80 = arith.constant 0.001953125 : f32
    %136 = vector.broadcast %cst_80 : f32 to vector<1x128xf32>
    %137 = arith.mulf %135, %136 : vector<1x128xf32>
    %cst_81 = arith.constant dense<0.000000e+00> : vector<1x128xf32>
    %138 = tpu.matmul %134, %3, %cst_81 {dimension_numbers = #tpu.dot_dimension_numbers<[1], [0], [0], [1], [0, 0, 1, 1], [], []>} : vector<1x128xf32>, vector<128x128xf32>, vector<1x128xf32> -> vector<1x128xf32>
    %cst_82 = arith.constant 0.001953125 : f32
    %139 = vector.broadcast %cst_82 : f32 to vector<1x128xf32>
    %140 = arith.mulf %138, %139 : vector<1x128xf32>
    %141 = arith.mulf %137, %137 : vector<1x128xf32>
    %142 = arith.subf %140, %141 : vector<1x128xf32>
    %cst_83 = arith.constant 0.000000e+00 : f32
    %143 = vector.broadcast %cst_83 : f32 to vector<1x128xf32>
    %144 = arith.maximumf %142, %143 : vector<1x128xf32>
    %c3 = arith.constant 3 : index
    %c0_84 = arith.constant 0 : index
    %145 = vector.load %arg7[%c3, %c0_84] : memref<4x128xf32, #tpu.memory_space<vmem>>, vector<1x128xf32>
    %cst_85 = arith.constant 9.99999974E-6 : f32
    %146 = vector.broadcast %cst_85 : f32 to vector<1x128xf32>
    %147 = arith.addf %144, %146 : vector<1x128xf32>
    %148 = math.rsqrt %147 : vector<1x128xf32>
    %149 = arith.mulf %145, %148 : vector<1x128xf32>
    %c3_86 = arith.constant 3 : index
    %c0_87 = arith.constant 0 : index
    %150 = vector.load %arg8[%c3_86, %c0_87] : memref<4x128xf32, #tpu.memory_space<vmem>>, vector<1x128xf32>
    %151 = arith.mulf %137, %149 : vector<1x128xf32>
    %152 = arith.subf %150, %151 : vector<1x128xf32>
    %153 = vector.broadcast %149 : vector<1x128xf32> to vector<32x128xf32>
    %154 = arith.mulf %129, %153 : vector<32x128xf32>
    %155 = vector.broadcast %152 : vector<1x128xf32> to vector<32x128xf32>
    %156 = arith.addf %154, %155 : vector<32x128xf32>
    %c0_88 = arith.constant 0 : index
    %c0_89 = arith.constant 0 : index
    %157 = vector.load %arg9[%c0_88, %c0_89] : memref<32x128xf32, #tpu.memory_space<vmem>>, vector<32x128xf32>
    tpu.vector_store %arg9[%c0_88, %c0_89], %156 {strides = array<i32>} : memref<32x128xf32, #tpu.memory_space<vmem>>, vector<32x128xf32>,
    return
  }
}

</mosaic_0001>

<llo_original>
// kernel: tpu_custom_call.1
$region0: #{tpu_custom_call.1}
  #allocation0 [shape = 'u32[]', space=smem, size = 0x4, offset = 0x4, fixed_abs, tag = 'smem constant byte address 0x4 - core index']
  #allocation1 [shape = 'u32[144,128]{1,0:T(1,128)}', space=vmem, size = 0x12000, scoped, tag = 'internal scratch']
  %s0 = inlined_call_operand.hbm [shape: f32[32,64], index: 0, kind: input, shape index: {}]
  %s1 = inlined_call_operand.hbm [shape: f32[32,32], index: 1, kind: input, shape index: {}]
  %s2 = inlined_call_operand.hbm [shape: f32[32,32], index: 2, kind: input, shape index: {}]
  %s3 = inlined_call_operand.hbm [shape: f32[3,64,128], index: 3, kind: input, shape index: {}]
  %s4 = inlined_call_operand.hbm [shape: f32[3,128,128], index: 4, kind: input, shape index: {}]
  %s5 = inlined_call_operand.hbm [shape: f32[64,128], index: 5, kind: input, shape index: {}]
  %s6 = inlined_call_operand.hbm [shape: f32[128,128], index: 6, kind: input, shape index: {}]
  %s7 = inlined_call_operand.vmem [shape: f32[4,128], index: 7, kind: input, shape index: {}]
  %s8 = inlined_call_operand.vmem [shape: f32[4,128], index: 8, kind: input, shape index: {}]
  %s9 = inlined_call_operand.hbm [shape: f32[32,128], index: 9, kind: output, shape index: {}]
  %s10 = sld [smem:[#allocation0]]
  $region74: #{tpu_custom_call.1} parent=0
    _
  %s12 = ssub.s32 1, %s10
  %s13 = scalar_select 0, %s12, %s10
  $region1: #{tpu_custom_call.1} parent=0
    #allocation2 [shape = 'u8[16384]{0}', space=vmem, size = 0x4000, scoped, tag = 'input window, operand 0, single buffered']
    #allocation3 [shape = 's32[1]{0}', space=sflag, size = 0x4, scoped, tag = 'scoped memory for tpu_custom_call.1']
    #allocation4 [shape = 's32[1]{0}', space=sflag, size = 0x4, scoped, tag = 'scoped memory for tpu_custom_call.1']
    #allocation5 [shape = 'u8[16384]{0}', space=vmem, size = 0x4000, scoped, tag = 'input window, operand 1, single buffered']
    #allocation6 [shape = 's32[1]{0}', space=sflag, size = 0x4, scoped, tag = 'scoped memory for tpu_custom_call.1']
    #allocation7 [shape = 'u8[16384]{0}', space=vmem, size = 0x4000, scoped, tag = 'input window, operand 2, single buffered']
    #allocation8 [shape = 'u8[98304]{0}', space=vmem, size = 0x18000, scoped, tag = 'input window, operand 3, single buffered']
    #allocation9 [shape = 's32[1]{0}', space=sflag, size = 0x4, scoped, tag = 'scoped memory for tpu_custom_call.1']
    #allocation10 [shape = 'u8[196608]{0}', space=vmem, size = 0x30000, scoped, tag = 'input window, operand 4, single buffered']
    #allocation11 [shape = 'u8[32768]{0}', space=vmem, size = 0x8000, scoped, tag = 'input window, operand 5, single buffered']
    #allocation12 [shape = 's32[1]{0}', space=sflag, size = 0x4, scoped, tag = 'scoped memory for tpu_custom_call.1']
    #allocation13 [shape = 'u8[65536]{0}', space=vmem, size = 0x10000, scoped, tag = 'input window, operand 6, single buffered']
    #allocation14 [shape = 'u8[16384]{0}', space=vmem, size = 0x4000, scoped, tag = 'output window, operand 0, single buffered']
    %14 = vsyncpa [#allocation3], 0
    %15 = vsyncpa [#allocation6], 0
    %16 = vsyncpa [#allocation9], 0
    %17 = vsyncpa [#allocation12], 0
    %18 = vsyncpa [#allocation4], 0
    // Predicated region
    $region2: #{tpu_custom_call.1} parent=1 // pred_check
      _
    $region3: #{tpu_custom_call.1} parent=1 // pred_check_branch
      %20 = sbr.rel (0) target = $region5
    $region4: #{tpu_custom_call.1} parent=1 // pred_region
      %s22 = ssub.s32 512, 512
      %23 = vsyncadd [#allocation3], %s22
      %s24 = sshll.u32 [#allocation2], 4
      %s25 = int_to_ptr.vmem [resolvable:$true] %s24
      %30 = dma.hbm_to_vmem [thread:$0]  %s0, 512, %s25, [#allocation3], 128, 128, 8
    $region5: #{tpu_custom_call.1} parent=1 // pred_fallthru
      _
    // Predicated region
    $region6: #{tpu_custom_call.1} parent=1 // pred_check
      _
    $region7: #{tpu_custom_call.1} parent=1 // pred_check_branch
      %32 = sbr.rel (0) target = $region9
    $region8: #{tpu_custom_call.1} parent=1 // pred_region
      %s34 = ssub.s32 512, 512
      %35 = vsyncadd [#allocation6], %s34
      %s36 = sshll.u32 [#allocation5], 4
      %s37 = int_to_ptr.vmem [resolvable:$true] %s36
      %42 = dma.hbm_to_vmem [thread:$0]  %s1, 512, %s37, [#allocation6], 128, 128, 8
    $region9: #{tpu_custom_call.1} parent=1 // pred_fallthru
      _
    // Predicated region
    $region10: #{tpu_custom_call.1} parent=1 // pred_check
      _
    $region11: #{tpu_custom_call.1} parent=1 // pred_check_branch
      %44 = sbr.rel (0) target = $region13
    $region12: #{tpu_custom_call.1} parent=1 // pred_region
      %s46 = ssub.s32 512, 512
      %47 = vsyncadd [#allocation6], %s46
      %s48 = sshll.u32 [#allocation7], 4
      %s49 = int_to_ptr.vmem [resolvable:$true] %s48
      %54 = dma.hbm_to_vmem [thread:$0]  %s2, 512, %s49, [#allocation6], 128, 128, 8
    $region13: #{tpu_custom_call.1} parent=1 // pred_fallthru
      _
    // Predicated region
    $region14: #{tpu_custom_call.1} parent=1 // pred_check
      _
    $region15: #{tpu_custom_call.1} parent=1 // pred_check_branch
      %56 = sbr.rel (0) target = $region17
    $region16: #{tpu_custom_call.1} parent=1 // pred_region
      %s58 = ssub.s32 3072, 3072
      %59 = vsyncadd [#allocation9], %s58
      %s60 = sshll.u32 [#allocation8], 4
      %s61 = int_to_ptr.vmem [resolvable:$true] %s60
      %66 = dma.hbm_to_vmem [thread:$0]  %s3, 3072, %s61, [#allocation9], 128, 128, 8
    $region17: #{tpu_custom_call.1} parent=1 // pred_fallthru
      _
    // Predicated region
    $region18: #{tpu_custom_call.1} parent=1 // pred_check
      _
    $region19: #{tpu_custom_call.1} parent=1 // pred_check_branch
      %68 = sbr.rel (0) target = $region21
    $region20: #{tpu_custom_call.1} parent=1 // pred_region
      %s70 = ssub.s32 6144, 6144
      %71 = vsyncadd [#allocation9], %s70
      %s72 = sshll.u32 [#allocation10], 4
      %s73 = int_to_ptr.vmem [resolvable:$true] %s72
      %78 = dma.hbm_to_vmem [thread:$0]  %s4, 6144, %s73, [#allocation9], 128, 128, 8
    $region21: #{tpu_custom_call.1} parent=1 // pred_fallthru
      _
    // Predicated region
    $region22: #{tpu_custom_call.1} parent=1 // pred_check
      _
    $region23: #{tpu_custom_call.1} parent=1 // pred_check_branch
      %80 = sbr.rel (0) target = $region25
    $region24: #{tpu_custom_call.1} parent=1 // pred_region
      %s82 = ssub.s32 1024, 1024
      %83 = vsyncadd [#allocation12], %s82
      %s84 = sshll.u32 [#allocation11], 4
      %s85 = int_to_ptr.vmem [resolvable:$true] %s84
      %90 = dma.hbm_to_vmem [thread:$0]  %s5, 1024, %s85, [#allocation12], 128, 128, 8
    $region25: #{tpu_custom_call.1} parent=1 // pred_fallthru
      _
    // Predicated region
    $region26: #{tpu_custom_call.1} parent=1 // pred_check
      _
    $region27: #{tpu_custom_call.1} parent=1 // pred_check_branch
      %92 = sbr.rel (0) target = $region29
    $region28: #{tpu_custom_call.1} parent=1 // pred_region
      %s94 = ssub.s32 2048, 2048
      %95 = vsyncadd [#allocation12], %s94
      %s96 = sshll.u32 [#allocation13], 4
      %s97 = int_to_ptr.vmem [resolvable:$true] %s96
      %102 = dma.hbm_to_vmem [thread:$0]  %s6, 2048, %s97, [#allocation12], 128, 128, 8
    $region29: #{tpu_custom_call.1} parent=1 // pred_fallthru
      _
    // Predicated region
    $region30: #{tpu_custom_call.1} parent=1 // pred_check
      _
    $region31: #{tpu_custom_call.1} parent=1 // pred_check_branch
      %104 = sbr.rel (0) target = $region33
    $region32: #{tpu_custom_call.1} parent=1 // pred_region
      _
    $region33: #{tpu_custom_call.1} parent=1 // pred_fallthru
      _
    // Predicated region
    $region34: #{tpu_custom_call.1} parent=1 // pred_check
      _
    $region35: #{tpu_custom_call.1} parent=1 // pred_check_branch
      %106 = sbr.rel (0) target = $region37
    $region36: #{tpu_custom_call.1} parent=1 // pred_region
      _
    $region37: #{tpu_custom_call.1} parent=1 // pred_fallthru
      _
    // Predicated region
    $region38: #{tpu_custom_call.1} parent=1 // pred_check
      _
    $region39: #{tpu_custom_call.1} parent=1 // pred_check_branch
      %108 = sbr.rel (0) target = $region41
    $region40: #{tpu_custom_call.1} parent=1 // pred_region
      %109 = dma.done [#allocation3], 512
    $region41: #{tpu_custom_call.1} parent=1 // pred_fallthru
      _
    // Predicated region
    $region42: #{tpu_custom_call.1} parent=1 // pred_check
      _
    $region43: #{tpu_custom_call.1} parent=1 // pred_check_branch
      %111 = sbr.rel (0) target = $region45
    $region44: #{tpu_custom_call.1} parent=1 // pred_region
      %112 = dma.done [#allocation6], 512
    $region45: #{tpu_custom_call.1} parent=1 // pred_fallthru
      _
    // Predicated region
    $region46: #{tpu_custom_call.1} parent=1 // pred_check
      _
    $region47: #{tpu_custom_call.1} parent=1 // pred_check_branch
      %114 = sbr.rel (0) target = $region49
    $region48: #{tpu_custom_call.1} parent=1 // pred_region
      %115 = dma.done [#allocation6], 512
    $region49: #{tpu_custom_call.1} parent=1 // pred_fallthru
      _
    // Predicated region
    $region50: #{tpu_custom_call.1} parent=1 // pred_check
      _
    $region51: #{tpu_custom_call.1} parent=1 // pred_check_branch
      %117 = sbr.rel (0) target = $region53
    $region52: #{tpu_custom_call.1} parent=1 // pred_region
      %118 = dma.done [#allocation9], 3072
    $region53: #{tpu_custom_call.1} parent=1 // pred_fallthru
      _
    // Predicated region
    $region54: #{tpu_custom_call.1} parent=1 // pred_check
      _
    $region55: #{tpu_custom_call.1} parent=1 // pred_check_branch
      %120 = sbr.rel (0) target = $region57
    $region56: #{tpu_custom_call.1} parent=1 // pred_region
      %121 = dma.done [#allocation9], 6144
    $region57: #{tpu_custom_call.1} parent=1 // pred_fallthru
      _
    // Predicated region
    $region58: #{tpu_custom_call.1} parent=1 // pred_check
      _
    $region59: #{tpu_custom_call.1} parent=1 // pred_check_branch
      %123 = sbr.rel (0) target = $region61
    $region60: #{tpu_custom_call.1} parent=1 // pred_region
      %124 = dma.done [#allocation12], 1024
    $region61: #{tpu_custom_call.1} parent=1 // pred_fallthru
      _
    // Predicated region
    $region62: #{tpu_custom_call.1} parent=1 // pred_check
      _
    $region63: #{tpu_custom_call.1} parent=1 // pred_check_branch
      %126 = sbr.rel (0) target = $region65
    $region64: #{tpu_custom_call.1} parent=1 // pred_region
      %127 = dma.done [#allocation12], 2048
    $region65: #{tpu_custom_call.1} parent=1 // pred_fallthru
      _
    %v128 = vld [vmem:[#allocation2] sm:$0xff]
    %v129 = vld [vmem:[#allocation2 + $0x8] sm:$0xff]
    %v130 = vld [vmem:[#allocation2 + $0x10] sm:$0xff]
    %v131 = vld [vmem:[#allocation2 + $0x18] sm:$0xff]
    %v132 = vld [vmem:[#allocation5] sm:$0xff]
    %v133 = vld [vmem:[#allocation5 + $0x8] sm:$0xff]
    %v134 = vld [vmem:[#allocation5 + $0x10] sm:$0xff]
    %v135 = vld [vmem:[#allocation5 + $0x18] sm:$0xff]
    %v136 = vld [vmem:[#allocation7] sm:$0xff]
    %v137 = vld [vmem:[#allocation7 + $0x8] sm:$0xff]
    %v138 = vld [vmem:[#allocation7 + $0x10] sm:$0xff]
    %v139 = vld [vmem:[#allocation7 + $0x18] sm:$0xff]
    %v140 = vld [vmem:[#allocation13] sm:$0xff]
    %v141 = vld [vmem:[#allocation13 + $0x8] sm:$0xff]
    %v142 = vld [vmem:[#allocation13 + $0x10] sm:$0xff]
    %v143 = vld [vmem:[#allocation13 + $0x18] sm:$0xff]
    %v144 = vld [vmem:[#allocation13 + $0x20] sm:$0xff]
    %v145 = vld [vmem:[#allocation13 + $0x28] sm:$0xff]
    %v146 = vld [vmem:[#allocation13 + $0x30] sm:$0xff]
    %v147 = vld [vmem:[#allocation13 + $0x38] sm:$0xff]
    %v148 = vld [vmem:[#allocation13 + $0x40] sm:$0xff]
    %v149 = vld [vmem:[#allocation13 + $0x48] sm:$0xff]
    %v150 = vld [vmem:[#allocation13 + $0x50] sm:$0xff]
    %v151 = vld [vmem:[#allocation13 + $0x58] sm:$0xff]
    %v152 = vld [vmem:[#allocation13 + $0x60] sm:$0xff]
    %v153 = vld [vmem:[#allocation13 + $0x68] sm:$0xff]
    %v154 = vld [vmem:[#allocation13 + $0x70] sm:$0xff]
    %v155 = vld [vmem:[#allocation13 + $0x78] sm:$0xff]
    %vm156 = vcmask 261120
    %v158 = vsel %vm156, %v132, 0
    %v161 = vsel %vm156, %v133, 0
    %v164 = vsel %vm156, %v134, 0
    %v167 = vsel %vm156, %v135, 0
    %169 = vmatprep.subr.mxu0 0.0
    %170 = vmatpush1.msra.mxu0 %v128
    %171 = vmatprep.subr.mxu0 0.0
    %172 = vmatpush1.msra.mxu0 %v129
    %173 = vmatprep.subr.mxu0 0.0
    %174 = vmatpush1.msra.mxu0 %v130
    %175 = vmatprep.subr.mxu0 0.0
    %176 = vmatpush1.msra.mxu0 %v131
    %177 = vmatprep.subr.mxu0 0.0
    %178 = vmatpush1.msra.mxu0 0.0
    %179 = vmatprep.subr.mxu0 0.0
    %180 = vmatpush1.msra.mxu0 0.0
    %181 = vmatprep.subr.mxu0 0.0
    %182 = vmatpush1.msra.mxu0 0.0
    %183 = vmatprep.subr.mxu0 0.0
    %184 = vmatpush1.msra.mxu0 0.0
    %185 = vmatprep.subr.mxu0 0.0
    %186 = vmatpush1.msra.mxu0 0.0
    %187 = vmatprep.subr.mxu0 0.0
    %188 = vmatpush1.msra.mxu0 0.0
    %189 = vmatprep.subr.mxu0 0.0
    %190 = vmatpush1.msra.mxu0 0.0
    %191 = vmatprep.subr.mxu0 0.0
    %192 = vmatpush1.msra.mxu0 0.0
    %193 = vmatprep.subr.mxu0 0.0
    %194 = vmatpush1.msra.mxu0 0.0
    %195 = vmatprep.subr.mxu0 0.0
    %196 = vmatpush1.msra.mxu0 0.0
    %197 = vmatprep.subr.mxu0 0.0
    %198 = vmatpush1.msra.mxu0 0.0
    %199 = vmatprep.subr.mxu0 0.0
    %200 = vmatpush1.msra.mxu0 0.0
    %201 = vmatprep.subr.mxu0 0.0
    %202 = vmatpush1.msra.mxu0 0.0
    %203 = vmatprep.subr.mxu0 0.0
    %204 = vmatpush1.msra.mxu0 0.0
    %205 = vmatprep.subr.mxu0 0.0
    %206 = vmatpush1.msra.mxu0 0.0
    %207 = vmatprep.subr.mxu0 0.0
    %208 = vmatpush1.msra.mxu0 0.0
    %209 = vmatprep.subr.mxu0 0.0
    %210 = vmatpush1.msra.mxu0 0.0
    %211 = vmatprep.subr.mxu0 0.0
    %212 = vmatpush1.msra.mxu0 0.0
    %213 = vmatprep.subr.mxu0 0.0
    %214 = vmatpush1.msra.mxu0 0.0
    %215 = vmatprep.subr.mxu0 0.0
    %216 = vmatpush1.msra.mxu0 0.0
    %217 = vmatprep.subr.mxu0 0.0
    %218 = vmatpush1.msra.mxu0 0.0
    %219 = vmatprep.subr.mxu0 0.0
    %220 = vmatpush1.msra.mxu0 0.0
    %221 = vmatprep.subr.mxu0 0.0
    %222 = vmatpush1.msra.mxu0 0.0
    %223 = vmatprep.subr.mxu0 0.0
    %224 = vmatpush1.msra.mxu0 0.0
    %225 = vmatprep.subr.mxu0 0.0
    %226 = vmatpush1.msra.mxu0 0.0
    %227 = vmatprep.subr.mxu0 0.0
    %228 = vmatpush1.msra.mxu0 0.0
    %229 = vmatprep.subr.mxu0 0.0
    %230 = vmatpush1.msra.mxu0 0.0
    %231 = vmatprep.subr.mxu0 0.0
    %232 = vmatpush1.msra.mxu0 0.0
    %233 = vmatprep.mubr.f32.mxu0 0.0
    %234 = vmatmul.mubr.f32.gmra.mrb[0].mxu0 %v158
    %v235 = vpop.f32.mrb[0].mxu0
    %v236 = vadd.f32 0.0, %v235
    %v237 = vpop.f32.mrb[0].mxu0
    %238 = vmatprep.mubr.f32.mxu0 0.0
    %239 = vmatmul.mubr.f32.gmra.mrb[0].mxu0 %v161
    %v240 = vpop.f32.mrb[0].mxu0
    %v241 = vadd.f32 0.0, %v240
    %v242 = vpop.f32.mrb[0].mxu0
    %243 = vmatprep.mubr.f32.mxu0 0.0
    %244 = vmatmul.mubr.f32.gmra.mrb[0].mxu0 %v164
    %v245 = vpop.f32.mrb[0].mxu0
    %v246 = vadd.f32 0.0, %v245
    %v247 = vpop.f32.mrb[0].mxu0
    %248 = vmatprep.mubr.f32.mxu0 0.0
    %249 = vmatmul.mubr.f32.gmra.mrb[0].mxu0 %v167
    %v250 = vpop.f32.mrb[0].mxu0
    %v251 = vadd.f32 0.0, %v250
    %v252 = vpop.f32.mrb[0].mxu0
    %253 = vdwg.mxu0
    %v255 = vsel %vm156, %v136, 0
    %v258 = vsel %vm156, %v137, 0
    %v261 = vsel %vm156, %v138, 0
    %v264 = vsel %vm156, %v139, 0
    %266 = vmatprep.subr.mxu0 0.0
    %267 = vmatpush1.msra.mxu0 %v128
    %268 = vmatprep.subr.mxu0 0.0
    %269 = vmatpush1.msra.mxu0 %v129
    %270 = vmatprep.subr.mxu0 0.0
    %271 = vmatpush1.msra.mxu0 %v130
    %272 = vmatprep.subr.mxu0 0.0
    %273 = vmatpush1.msra.mxu0 %v131
    %274 = vmatprep.subr.mxu0 0.0
    %275 = vmatpush1.msra.mxu0 0.0
    %276 = vmatprep.subr.mxu0 0.0
    %277 = vmatpush1.msra.mxu0 0.0
    %278 = vmatprep.subr.mxu0 0.0
    %279 = vmatpush1.msra.mxu0 0.0
    %280 = vmatprep.subr.mxu0 0.0
    %281 = vmatpush1.msra.mxu0 0.0
    %282 = vmatprep.subr.mxu0 0.0
    %283 = vmatpush1.msra.mxu0 0.0
    %284 = vmatprep.subr.mxu0 0.0
    %285 = vmatpush1.msra.mxu0 0.0
    %286 = vmatprep.subr.mxu0 0.0
    %287 = vmatpush1.msra.mxu0 0.0
    %288 = vmatprep.subr.mxu0 0.0
    %289 = vmatpush1.msra.mxu0 0.0
    %290 = vmatprep.subr.mxu0 0.0
    %291 = vmatpush1.msra.mxu0 0.0
    %292 = vmatprep.subr.mxu0 0.0
    %293 = vmatpush1.msra.mxu0 0.0
    %294 = vmatprep.subr.mxu0 0.0
    %295 = vmatpush1.msra.mxu0 0.0
    %296 = vmatprep.subr.mxu0 0.0
    %297 = vmatpush1.msra.mxu0 0.0
    %298 = vmatprep.subr.mxu0 0.0
    %299 = vmatpush1.msra.mxu0 0.0
    %300 = vmatprep.subr.mxu0 0.0
    %301 = vmatpush1.msra.mxu0 0.0
    %302 = vmatprep.subr.mxu0 0.0
    %303 = vmatpush1.msra.mxu0 0.0
    %304 = vmatprep.subr.mxu0 0.0
    %305 = vmatpush1.msra.mxu0 0.0
    %306 = vmatprep.subr.mxu0 0.0
    %307 = vmatpush1.msra.mxu0 0.0
    %308 = vmatprep.subr.mxu0 0.0
    %309 = vmatpush1.msra.mxu0 0.0
    %310 = vmatprep.subr.mxu0 0.0
    %311 = vmatpush1.msra.mxu0 0.0
    %312 = vmatprep.subr.mxu0 0.0
    %313 = vmatpush1.msra.mxu0 0.0
    %314 = vmatprep.subr.mxu0 0.0
    %315 = vmatpush1.msra.mxu0 0.0
    %316 = vmatprep.subr.mxu0 0.0
    %317 = vmatpush1.msra.mxu0 0.0
    %318 = vmatprep.subr.mxu0 0.0
    %319 = vmatpush1.msra.mxu0 0.0
    %320 = vmatprep.subr.mxu0 0.0
    %321 = vmatpush1.msra.mxu0 0.0
    %322 = vmatprep.subr.mxu0 0.0
    %323 = vmatpush1.msra.mxu0 0.0
    %324 = vmatprep.subr.mxu0 0.0
    %325 = vmatpush1.msra.mxu0 0.0
    %326 = vmatprep.subr.mxu0 0.0
    %327 = vmatpush1.msra.mxu0 0.0
    %328 = vmatprep.subr.mxu0 0.0
    %329 = vmatpush1.msra.mxu0 0.0
    %330 = vmatprep.mubr.f32.mxu0 0.0
    %331 = vmatmul.mubr.f32.gmra.mrb[0].mxu0 %v255
    %v332 = vpop.f32.mrb[0].mxu0
    %v333 = vadd.f32 0.0, %v332
    %v334 = vpop.f32.mrb[0].mxu0
    %335 = vmatprep.mubr.f32.mxu0 0.0
    %336 = vmatmul.mubr.f32.gmra.mrb[0].mxu0 %v258
    %v337 = vpop.f32.mrb[0].mxu0
    %v338 = vadd.f32 0.0, %v337
    %v339 = vpop.f32.mrb[0].mxu0
    %340 = vmatprep.mubr.f32.mxu0 0.0
    %341 = vmatmul.mubr.f32.gmra.mrb[0].mxu0 %v261
    %v342 = vpop.f32.mrb[0].mxu0
    %v343 = vadd.f32 0.0, %v342
    %v344 = vpop.f32.mrb[0].mxu0
    %345 = vmatprep.mubr.f32.mxu0 0.0
    %346 = vmatmul.mubr.f32.gmra.mrb[0].mxu0 %v264
    %v347 = vpop.f32.mrb[0].mxu0
    %v348 = vadd.f32 0.0, %v347
    %v349 = vpop.f32.mrb[0].mxu0
    %350 = vdwg.mxu0
    %v351 = vld [vmem:[#allocation8] sm:$0xff]
    %v352 = vld [vmem:[#allocation8 + $0x8] sm:$0xff]
    %v353 = vld [vmem:[#allocation8 + $0x10] sm:$0xff]
    %v354 = vld [vmem:[#allocation8 + $0x18] sm:$0xff]
    %v355 = vld [vmem:[#allocation8 + $0x20] sm:$0xff]
    %v356 = vld [vmem:[#allocation8 + $0x28] sm:$0xff]
    %v357 = vld [vmem:[#allocation8 + $0x30] sm:$0xff]
    %v358 = vld [vmem:[#allocation8 + $0x38] sm:$0xff]
    %s359 = scalar_lea.vmem [#allocation8], 64
    %v360 = vld [vmem:[%s359] sm:$0xff]
    %v361 = vld [vmem:[%s359 + $0x8] sm:$0xff]
    %v362 = vld [vmem:[%s359 + $0x10] sm:$0xff]
    %v363 = vld [vmem:[%s359 + $0x18] sm:$0xff]
    %v364 = vld [vmem:[%s359 + $0x20] sm:$0xff]
    %v365 = vld [vmem:[%s359 + $0x28] sm:$0xff]
    %v366 = vld [vmem:[%s359 + $0x30] sm:$0xff]
    %v367 = vld [vmem:[%s359 + $0x38] sm:$0xff]
    %vm368 = vcmask 523264
    %v370 = vsel %vm368, %v128, 0
    %v373 = vsel %vm368, %v129, 0
    %v376 = vsel %vm368, %v130, 0
    %v379 = vsel %vm368, %v131, 0
    %381 = vmatprep.subr.mxu0 0.0
    %382 = vmatpush1.msra.mxu0 %v360
    %383 = vmatprep.subr.mxu0 0.0
    %384 = vmatpush1.msra.mxu0 %v361
    %385 = vmatprep.subr.mxu0 0.0
    %386 = vmatpush1.msra.mxu0 %v362
    %387 = vmatprep.subr.mxu0 0.0
    %388 = vmatpush1.msra.mxu0 %v363
    %389 = vmatprep.subr.mxu0 0.0
    %390 = vmatpush1.msra.mxu0 %v364
    %391 = vmatprep.subr.mxu0 0.0
    %392 = vmatpush1.msra.mxu0 %v365
    %393 = vmatprep.subr.mxu0 0.0
    %394 = vmatpush1.msra.mxu0 %v366
    %395 = vmatprep.subr.mxu0 0.0
    %396 = vmatpush1.msra.mxu0 %v367
    %397 = vmatprep.subr.mxu0 0.0
    %398 = vmatpush1.msra.mxu0 0.0
    %399 = vmatprep.subr.mxu0 0.0
    %400 = vmatpush1.msra.mxu0 0.0
    %401 = vmatprep.subr.mxu0 0.0
    %402 = vmatpush1.msra.mxu0 0.0
    %403 = vmatprep.subr.mxu0 0.0
    %404 = vmatpush1.msra.mxu0 0.0
    %405 = vmatprep.subr.mxu0 0.0
    %406 = vmatpush1.msra.mxu0 0.0
    %407 = vmatprep.subr.mxu0 0.0
    %408 = vmatpush1.msra.mxu0 0.0
    %409 = vmatprep.subr.mxu0 0.0
    %410 = vmatpush1.msra.mxu0 0.0
    %411 = vmatprep.subr.mxu0 0.0
    %412 = vmatpush1.msra.mxu0 0.0
    %413 = vmatprep.subr.mxu0 0.0
    %414 = vmatpush1.msra.mxu0 0.0
    %415 = vmatprep.subr.mxu0 0.0
    %416 = vmatpush1.msra.mxu0 0.0
    %417 = vmatprep.subr.mxu0 0.0
    %418 = vmatpush1.msra.mxu0 0.0
    %419 = vmatprep.subr.mxu0 0.0
    %420 = vmatpush1.msra.mxu0 0.0
    %421 = vmatprep.subr.mxu0 0.0
    %422 = vmatpush1.msra.mxu0 0.0
    %423 = vmatprep.subr.mxu0 0.0
    %424 = vmatpush1.msra.mxu0 0.0
    %425 = vmatprep.subr.mxu0 0.0
    %426 = vmatpush1.msra.mxu0 0.0
    %427 = vmatprep.subr.mxu0 0.0
    %428 = vmatpush1.msra.mxu0 0.0
    %429 = vmatprep.subr.mxu0 0.0
    %430 = vmatpush1.msra.mxu0 0.0
    %431 = vmatprep.subr.mxu0 0.0
    %432 = vmatpush1.msra.mxu0 0.0
    %433 = vmatprep.subr.mxu0 0.0
    %434 = vmatpush1.msra.mxu0 0.0
    %435 = vmatprep.subr.mxu0 0.0
    %436 = vmatpush1.msra.mxu0 0.0
    %437 = vmatprep.subr.mxu0 0.0
    %438 = vmatpush1.msra.mxu0 0.0
    %439 = vmatprep.subr.mxu0 0.0
    %440 = vmatpush1.msra.mxu0 0.0
    %441 = vmatprep.subr.mxu0 0.0
    %442 = vmatpush1.msra.mxu0 0.0
    %443 = vmatprep.subr.mxu0 0.0
    %444 = vmatpush1.msra.mxu0 0.0
    %445 = vmatprep.mubr.f32.mxu0 0.0
    %446 = vmatmul.mubr.f32.gmra.mrb[0].mxu0 %v370
    %v447 = vpop.f32.mrb[0].mxu0
    %v448 = vadd.f32 0.0, %v447
    %v449 = vpop.f32.mrb[0].mxu0
    %450 = vmatprep.mubr.f32.mxu0 0.0
    %451 = vmatmul.mubr.f32.gmra.mrb[0].mxu0 %v373
    %v452 = vpop.f32.mrb[0].mxu0
    %v453 = vadd.f32 0.0, %v452
    %v454 = vpop.f32.mrb[0].mxu0
    %455 = vmatprep.mubr.f32.mxu0 0.0
    %456 = vmatmul.mubr.f32.gmra.mrb[0].mxu0 %v376
    %v457 = vpop.f32.mrb[0].mxu0
    %v458 = vadd.f32 0.0, %v457
    %v459 = vpop.f32.mrb[0].mxu0
    %460 = vmatprep.mubr.f32.mxu0 0.0
    %461 = vmatmul.mubr.f32.gmra.mrb[0].mxu0 %v379
    %v462 = vpop.f32.mrb[0].mxu0
    %v463 = vadd.f32 0.0, %v462
    %v464 = vpop.f32.mrb[0].mxu0
    %465 = vdwg.mxu0
    %v467 = vsel %vm368, %v236, 0
    %v470 = vsel %vm368, %v241, 0
    %v473 = vsel %vm368, %v246, 0
    %v476 = vsel %vm368, %v251, 0
    %478 = vmatprep.subr.mxu0 0.0
    %479 = vmatpush1.msra.mxu0 %v351
    %480 = vmatprep.subr.mxu0 0.0
    %481 = vmatpush1.msra.mxu0 %v352
    %482 = vmatprep.subr.mxu0 0.0
    %483 = vmatpush1.msra.mxu0 %v353
    %484 = vmatprep.subr.mxu0 0.0
    %485 = vmatpush1.msra.mxu0 %v354
    %486 = vmatprep.subr.mxu0 0.0
    %487 = vmatpush1.msra.mxu0 %v355
    %488 = vmatprep.subr.mxu0 0.0
    %489 = vmatpush1.msra.mxu0 %v356
    %490 = vmatprep.subr.mxu0 0.0
    %491 = vmatpush1.msra.mxu0 %v357
    %492 = vmatprep.subr.mxu0 0.0
    %493 = vmatpush1.msra.mxu0 %v358
    %494 = vmatprep.subr.mxu0 0.0
    %495 = vmatpush1.msra.mxu0 0.0
    %496 = vmatprep.subr.mxu0 0.0
    %497 = vmatpush1.msra.mxu0 0.0
    %498 = vmatprep.subr.mxu0 0.0
    %499 = vmatpush1.msra.mxu0 0.0
    %500 = vmatprep.subr.mxu0 0.0
    %501 = vmatpush1.msra.mxu0 0.0
    %502 = vmatprep.subr.mxu0 0.0
    %503 = vmatpush1.msra.mxu0 0.0
    %504 = vmatprep.subr.mxu0 0.0
    %505 = vmatpush1.msra.mxu0 0.0
    %506 = vmatprep.subr.mxu0 0.0
    %507 = vmatpush1.msra.mxu0 0.0
    %508 = vmatprep.subr.mxu0 0.0
    %509 = vmatpush1.msra.mxu0 0.0
    %510 = vmatprep.subr.mxu0 0.0
    %511 = vmatpush1.msra.mxu0 0.0
    %512 = vmatprep.subr.mxu0 0.0
    %513 = vmatpush1.msra.mxu0 0.0
    %514 = vmatprep.subr.mxu0 0.0
    %515 = vmatpush1.msra.mxu0 0.0
    %516 = vmatprep.subr.mxu0 0.0
    %517 = vmatpush1.msra.mxu0 0.0
    %518 = vmatprep.subr.mxu0 0.0
    %519 = vmatpush1.msra.mxu0 0.0
    %520 = vmatprep.subr.mxu0 0.0
    %521 = vmatpush1.msra.mxu0 0.0
    %522 = vmatprep.subr.mxu0 0.0
    %523 = vmatpush1.msra.mxu0 0.0
    %524 = vmatprep.subr.mxu0 0.0
    %525 = vmatpush1.msra.mxu0 0.0
    %526 = vmatprep.subr.mxu0 0.0
    %527 = vmatpush1.msra.mxu0 0.0
    %528 = vmatprep.subr.mxu0 0.0
    %529 = vmatpush1.msra.mxu0 0.0
    %530 = vmatprep.subr.mxu0 0.0
    %531 = vmatpush1.msra.mxu0 0.0
    %532 = vmatprep.subr.mxu0 0.0
    %533 = vmatpush1.msra.mxu0 0.0
    %534 = vmatprep.subr.mxu0 0.0
    %535 = vmatpush1.msra.mxu0 0.0
    %536 = vmatprep.subr.mxu0 0.0
    %537 = vmatpush1.msra.mxu0 0.0
    %538 = vmatprep.subr.mxu0 0.0
    %539 = vmatpush1.msra.mxu0 0.0
    %540 = vmatprep.subr.mxu0 0.0
    %541 = vmatpush1.msra.mxu0 0.0
    %542 = vmatprep.mubr.f32.mxu0 0.0
    %543 = vmatmul.mubr.f32.gmra.mrb[0].mxu0 %v467
    %v544 = vpop.f32.mrb[0].mxu0
    %v545 = vadd.f32 %v448, %v544
    %v546 = vpop.f32.mrb[0].mxu0
    %547 = vmatprep.mubr.f32.mxu0 0.0
    %548 = vmatmul.mubr.f32.gmra.mrb[0].mxu0 %v470
    %v549 = vpop.f32.mrb[0].mxu0
    %v550 = vadd.f32 %v453, %v549
    %v551 = vpop.f32.mrb[0].mxu0
    %552 = vmatprep.mubr.f32.mxu0 0.0
    %553 = vmatmul.mubr.f32.gmra.mrb[0].mxu0 %v473
    %v554 = vpop.f32.mrb[0].mxu0
    %v555 = vadd.f32 %v458, %v554
    %v556 = vpop.f32.mrb[0].mxu0
    %557 = vmatprep.mubr.f32.mxu0 0.0
    %558 = vmatmul.mubr.f32.gmra.mrb[0].mxu0 %v476
    %v559 = vpop.f32.mrb[0].mxu0
    %v560 = vadd.f32 %v463, %v559
    %v561 = vpop.f32.mrb[0].mxu0
    %562 = vdwg.mxu0
    %s563 = scalar_lea.vmem [#allocation8], 128
    %v564 = vld [vmem:[%s563] sm:$0xff]
    %v565 = vld [vmem:[%s563 + $0x8] sm:$0xff]
    %v566 = vld [vmem:[%s563 + $0x10] sm:$0xff]
    %v567 = vld [vmem:[%s563 + $0x18] sm:$0xff]
    %v568 = vld [vmem:[%s563 + $0x20] sm:$0xff]
    %v569 = vld [vmem:[%s563 + $0x28] sm:$0xff]
    %v570 = vld [vmem:[%s563 + $0x30] sm:$0xff]
    %v571 = vld [vmem:[%s563 + $0x38] sm:$0xff]
    %v573 = vsel %vm368, %v333, 0
    %v576 = vsel %vm368, %v338, 0
    %v579 = vsel %vm368, %v343, 0
    %v582 = vsel %vm368, %v348, 0
    %584 = vmatprep.subr.mxu0 0.0
    %585 = vmatpush1.msra.mxu0 %v564
    %586 = vmatprep.subr.mxu0 0.0
    %587 = vmatpush1.msra.mxu0 %v565
    %588 = vmatprep.subr.mxu0 0.0
    %589 = vmatpush1.msra.mxu0 %v566
    %590 = vmatprep.subr.mxu0 0.0
    %591 = vmatpush1.msra.mxu0 %v567
    %592 = vmatprep.subr.mxu0 0.0
    %593 = vmatpush1.msra.mxu0 %v568
    %594 = vmatprep.subr.mxu0 0.0
    %595 = vmatpush1.msra.mxu0 %v569
    %596 = vmatprep.subr.mxu0 0.0
    %597 = vmatpush1.msra.mxu0 %v570
    %598 = vmatprep.subr.mxu0 0.0
    %599 = vmatpush1.msra.mxu0 %v571
    %600 = vmatprep.subr.mxu0 0.0
    %601 = vmatpush1.msra.mxu0 0.0
    %602 = vmatprep.subr.mxu0 0.0
    %603 = vmatpush1.msra.mxu0 0.0
    %604 = vmatprep.subr.mxu0 0.0
    %605 = vmatpush1.msra.mxu0 0.0
    %606 = vmatprep.subr.mxu0 0.0
    %607 = vmatpush1.msra.mxu0 0.0
    %608 = vmatprep.subr.mxu0 0.0
    %609 = vmatpush1.msra.mxu0 0.0
    %610 = vmatprep.subr.mxu0 0.0
    %611 = vmatpush1.msra.mxu0 0.0
    %612 = vmatprep.subr.mxu0 0.0
    %613 = vmatpush1.msra.mxu0 0.0
    %614 = vmatprep.subr.mxu0 0.0
    %615 = vmatpush1.msra.mxu0 0.0
    %616 = vmatprep.subr.mxu0 0.0
    %617 = vmatpush1.msra.mxu0 0.0
    %618 = vmatprep.subr.mxu0 0.0
    %619 = vmatpush1.msra.mxu0 0.0
    %620 = vmatprep.subr.mxu0 0.0
    %621 = vmatpush1.msra.mxu0 0.0
    %622 = vmatprep.subr.mxu0 0.0
    %623 = vmatpush1.msra.mxu0 0.0
    %624 = vmatprep.subr.mxu0 0.0
    %625 = vmatpush1.msra.mxu0 0.0
    %626 = vmatprep.subr.mxu0 0.0
    %627 = vmatpush1.msra.mxu0 0.0
    %628 = vmatprep.subr.mxu0 0.0
    %629 = vmatpush1.msra.mxu0 0.0
    %630 = vmatprep.subr.mxu0 0.0
    %631 = vmatpush1.msra.mxu0 0.0
    %632 = vmatprep.subr.mxu0 0.0
    %633 = vmatpush1.msra.mxu0 0.0
    %634 = vmatprep.subr.mxu0 0.0
    %635 = vmatpush1.msra.mxu0 0.0
    %636 = vmatprep.subr.mxu0 0.0
    %637 = vmatpush1.msra.mxu0 0.0
    %638 = vmatprep.subr.mxu0 0.0
    %639 = vmatpush1.msra.mxu0 0.0
    %640 = vmatprep.subr.mxu0 0.0
    %641 = vmatpush1.msra.mxu0 0.0
    %642 = vmatprep.subr.mxu0 0.0
    %643 = vmatpush1.msra.mxu0 0.0
    %644 = vmatprep.subr.mxu0 0.0
    %645 = vmatpush1.msra.mxu0 0.0
    %646 = vmatprep.subr.mxu0 0.0
    %647 = vmatpush1.msra.mxu0 0.0
    %648 = vmatprep.mubr.f32.mxu0 0.0
    %649 = vmatmul.mubr.f32.gmra.mrb[0].mxu0 %v573
    %v650 = vpop.f32.mrb[0].mxu0
    %v651 = vadd.f32 0.0, %v650
    %v652 = vpop.f32.mrb[0].mxu0
    %653 = vmatprep.mubr.f32.mxu0 0.0
    %654 = vmatmul.mubr.f32.gmra.mrb[0].mxu0 %v576
    %v655 = vpop.f32.mrb[0].mxu0
    %v656 = vadd.f32 0.0, %v655
    %v657 = vpop.f32.mrb[0].mxu0
    %658 = vmatprep.mubr.f32.mxu0 0.0
    %659 = vmatmul.mubr.f32.gmra.mrb[0].mxu0 %v579
    %v660 = vpop.f32.mrb[0].mxu0
    %v661 = vadd.f32 0.0, %v660
    %v662 = vpop.f32.mrb[0].mxu0
    %663 = vmatprep.mubr.f32.mxu0 0.0
    %664 = vmatmul.mubr.f32.gmra.mrb[0].mxu0 %v582
    %v665 = vpop.f32.mrb[0].mxu0
    %v666 = vadd.f32 0.0, %v665
    %v667 = vpop.f32.mrb[0].mxu0
    %668 = vdwg.mxu0
    %v669 = vadd.f32 %v545, %v651
    %v670 = vadd.f32 %v550, %v656
    %v671 = vadd.f32 %v555, %v661
    %v672 = vadd.f32 %v560, %v666
    %v673 = vadd.f32 %v669, %v670
    %v674 = vadd.f32 %v673, %v671
    %v675 = vadd.f32 %v674, %v672
    %v676 = vrot.slane %v675, 4
    %v677 = vadd.f32 %v675, %v676
    %v678 = vrot.slane %v677, 2
    %v679 = vadd.f32 %v677, %v678
    %v680 = vrot.slane %v679, 1
    %v681 = vadd.f32 %v679, %v680
    %v682 = vmul.f32 %v669, %v669
    %v683 = vmul.f32 %v670, %v670
    %v684 = vmul.f32 %v671, %v671
    %v685 = vmul.f32 %v672, %v672
    %v686 = vadd.f32 %v682, %v683
    %v687 = vadd.f32 %v686, %v684
    %v688 = vadd.f32 %v687, %v685
    %v689 = vrot.slane %v688, 4
    %v690 = vadd.f32 %v688, %v689
    %v691 = vrot.slane %v690, 2
    %v692 = vadd.f32 %v690, %v691
    %v693 = vrot.slane %v692, 1
    %v694 = vadd.f32 %v692, %v693
    %695 = vmatprep.subr.mxu0 0.0
    %696 = vmatpush1.msra.mxu0 %v140
    %697 = vmatprep.subr.mxu0 0.0
    %698 = vmatpush1.msra.mxu0 %v141
    %699 = vmatprep.subr.mxu0 0.0
    %700 = vmatpush1.msra.mxu0 %v142
    %701 = vmatprep.subr.mxu0 0.0
    %702 = vmatpush1.msra.mxu0 %v143
    %703 = vmatprep.subr.mxu0 0.0
    %704 = vmatpush1.msra.mxu0 %v144
    %705 = vmatprep.subr.mxu0 0.0
    %706 = vmatpush1.msra.mxu0 %v145
    %707 = vmatprep.subr.mxu0 0.0
    %708 = vmatpush1.msra.mxu0 %v146
    %709 = vmatprep.subr.mxu0 0.0
    %710 = vmatpush1.msra.mxu0 %v147
    %711 = vmatprep.subr.mxu0 0.0
    %712 = vmatpush1.msra.mxu0 %v148
    %713 = vmatprep.subr.mxu0 0.0
    %714 = vmatpush1.msra.mxu0 %v149
    %715 = vmatprep.subr.mxu0 0.0
    %716 = vmatpush1.msra.mxu0 %v150
    %717 = vmatprep.subr.mxu0 0.0
    %718 = vmatpush1.msra.mxu0 %v151
    %719 = vmatprep.subr.mxu0 0.0
    %720 = vmatpush1.msra.mxu0 %v152
    %721 = vmatprep.subr.mxu0 0.0
    %722 = vmatpush1.msra.mxu0 %v153
    %723 = vmatprep.subr.mxu0 0.0
    %724 = vmatpush1.msra.mxu0 %v154
    %725 = vmatprep.subr.mxu0 0.0
    %726 = vmatpush1.msra.mxu0 %v155
    %727 = vmatprep.subr.mxu0 0.0
    %728 = vmatpush1.msra.mxu0 0.0
    %729 = vmatprep.subr.mxu0 0.0
    %730 = vmatpush1.msra.mxu0 0.0
    %731 = vmatprep.subr.mxu0 0.0
    %732 = vmatpush1.msra.mxu0 0.0
    %733 = vmatprep.subr.mxu0 0.0
    %734 = vmatpush1.msra.mxu0 0.0
    %735 = vmatprep.subr.mxu0 0.0
    %736 = vmatpush1.msra.mxu0 0.0
    %737 = vmatprep.subr.mxu0 0.0
    %738 = vmatpush1.msra.mxu0 0.0
    %739 = vmatprep.subr.mxu0 0.0
    %740 = vmatpush1.msra.mxu0 0.0
    %741 = vmatprep.subr.mxu0 0.0
    %742 = vmatpush1.msra.mxu0 0.0
    %743 = vmatprep.subr.mxu0 0.0
    %744 = vmatpush1.msra.mxu0 0.0
    %745 = vmatprep.subr.mxu0 0.0
    %746 = vmatpush1.msra.mxu0 0.0
    %747 = vmatprep.subr.mxu0 0.0
    %748 = vmatpush1.msra.mxu0 0.0
    %749 = vmatprep.subr.mxu0 0.0
    %750 = vmatpush1.msra.mxu0 0.0
    %751 = vmatprep.subr.mxu0 0.0
    %752 = vmatpush1.msra.mxu0 0.0
    %753 = vmatprep.subr.mxu0 0.0
    %754 = vmatpush1.msra.mxu0 0.0
    %755 = vmatprep.subr.mxu0 0.0
    %756 = vmatpush1.msra.mxu0 0.0
    %757 = vmatprep.subr.mxu0 0.0
    %758 = vmatpush1.msra.mxu0 0.0
    %759 = vmatprep.mubr.f32.mxu0 0.0
    %760 = vmatmul.mubr.f32.gmra.mrb[0].mxu0 %v681
    %v761 = vpop.f32.mrb[0].mxu0
    %v762 = vadd.f32 0.0, %v761
    %v763 = vpop.f32.mrb[0].mxu0
    %764 = vdwg.mxu0
    %v765 = vmul.f32 %v762, 0.001953125
    %766 = vmatprep.subr.mxu0 0.0
    %767 = vmatpush1.msra.mxu0 %v140
    %768 = vmatprep.subr.mxu0 0.0
    %769 = vmatpush1.msra.mxu0 %v141
    %770 = vmatprep.subr.mxu0 0.0
    %771 = vmatpush1.msra.mxu0 %v142
    %772 = vmatprep.subr.mxu0 0.0
    %773 = vmatpush1.msra.mxu0 %v143
    %774 = vmatprep.subr.mxu0 0.0
    %775 = vmatpush1.msra.mxu0 %v144
    %776 = vmatprep.subr.mxu0 0.0
    %777 = vmatpush1.msra.mxu0 %v145
    %778 = vmatprep.subr.mxu0 0.0
    %779 = vmatpush1.msra.mxu0 %v146
    %780 = vmatprep.subr.mxu0 0.0
    %781 = vmatpush1.msra.mxu0 %v147
    %782 = vmatprep.subr.mxu0 0.0
    %783 = vmatpush1.msra.mxu0 %v148
    %784 = vmatprep.subr.mxu0 0.0
    %785 = vmatpush1.msra.mxu0 %v149
    %786 = vmatprep.subr.mxu0 0.0
    %787 = vmatpush1.msra.mxu0 %v150
    %788 = vmatprep.subr.mxu0 0.0
    %789 = vmatpush1.msra.mxu0 %v151
    %790 = vmatprep.subr.mxu0 0.0
    %791 = vmatpush1.msra.mxu0 %v152
    %792 = vmatprep.subr.mxu0 0.0
    %793 = vmatpush1.msra.mxu0 %v153
    %794 = vmatprep.subr.mxu0 0.0
    %795 = vmatpush1.msra.mxu0 %v154
    %796 = vmatprep.subr.mxu0 0.0
    %797 = vmatpush1.msra.mxu0 %v155
    %798 = vmatprep.subr.mxu0 0.0
    %799 = vmatpush1.msra.mxu0 0.0
    %800 = vmatprep.subr.mxu0 0.0
    %801 = vmatpush1.msra.mxu0 0.0
    %802 = vmatprep.subr.mxu0 0.0
    %803 = vmatpush1.msra.mxu0 0.0
    %804 = vmatprep.subr.mxu0 0.0
    %805 = vmatpush1.msra.mxu0 0.0
    %806 = vmatprep.subr.mxu0 0.0
    %807 = vmatpush1.msra.mxu0 0.0
    %808 = vmatprep.subr.mxu0 0.0
    %809 = vmatpush1.msra.mxu0 0.0
    %810 = vmatprep.subr.mxu0 0.0
    %811 = vmatpush1.msra.mxu0 0.0
    %812 = vmatprep.subr.mxu0 0.0
    %813 = vmatpush1.msra.mxu0 0.0
    %814 = vmatprep.subr.mxu0 0.0
    %815 = vmatpush1.msra.mxu0 0.0
    %816 = vmatprep.subr.mxu0 0.0
    %817 = vmatpush1.msra.mxu0 0.0
    %818 = vmatprep.subr.mxu0 0.0
    %819 = vmatpush1.msra.mxu0 0.0
    %820 = vmatprep.subr.mxu0 0.0
    %821 = vmatpush1.msra.mxu0 0.0
    %822 = vmatprep.subr.mxu0 0.0
    %823 = vmatpush1.msra.mxu0 0.0
    %824 = vmatprep.subr.mxu0 0.0
    %825 = vmatpush1.msra.mxu0 0.0
    %826 = vmatprep.subr.mxu0 0.0
    %827 = vmatpush1.msra.mxu0 0.0
    %828 = vmatprep.subr.mxu0 0.0
    %829 = vmatpush1.msra.mxu0 0.0
    %830 = vmatprep.mubr.f32.mxu0 0.0
    %831 = vmatmul.mubr.f32.gmra.mrb[0].mxu0 %v694
    %v832 = vpop.f32.mrb[0].mxu0
    %v833 = vadd.f32 0.0, %v832
    %v834 = vpop.f32.mrb[0].mxu0
    %835 = vdwg.mxu0
    %v836 = vmul.f32 %v833, 0.001953125
    %v837 = vmul.f32 %v765, %v765
    %v838 = vsub.f32 %v836, %v837
    %v839 = vmax.f32 %v838, 0.0
    %v840 = vld [vmem:[%s7] sm:$0x1]
    %v841 = vadd.f32 %v839, 1e-05
    %v842 = vrsqrt.pop %v841
    %v843 = vmul.f32 %v840, %v842
    %v844 = vld [vmem:[%s8] sm:$0x1]
    %v845 = vmul.f32 %v765, %v843
    %v846 = vsub.f32 %v844, %v845
    %v847 = vlaneseq
    %v848 = vshrl.u32 %v847, 7
    %v849 = vsub.s32 0, %v848
    %v850 = vrot.slane %v843, %v849
    %v851 = vmul.f32 %v669, %v850
    %v852 = vmul.f32 %v670, %v850
    %v853 = vmul.f32 %v671, %v850
    %v854 = vmul.f32 %v672, %v850
    %v855 = vlaneseq
    %v856 = vshrl.u32 %v855, 7
    %v857 = vsub.s32 0, %v856
    %v858 = vrot.slane %v846, %v857
    %v859 = vadd.f32 %v851, %v858
    %v860 = vadd.f32 %v852, %v858
    %v861 = vadd.f32 %v853, %v858
    %v862 = vadd.f32 %v854, %v858
    %v863 = vmul.f32 %v859, 0.5
    %v864 = vmul.f32 %v860, 0.5
    %v865 = vmul.f32 %v861, 0.5
    %v866 = vmul.f32 %v862, 0.5
    %v867 = vmul.f32 %v859, 0.70710677
    %v868 = vmul.f32 %v860, 0.70710677
    %v869 = vmul.f32 %v861, 0.70710677
    %v870 = vmul.f32 %v862, 0.70710677
    %v871 = verf.f32.pop %v867
    %v872 = verf.f32.pop %v868
    %v873 = verf.f32.pop %v869
    %v874 = verf.f32.pop %v870
    %v875 = vadd.f32 %v871, 1.0
    %v876 = vadd.f32 %v872, 1.0
    %v877 = vadd.f32 %v873, 1.0
    %v878 = vadd.f32 %v874, 1.0
    %v879 = vmul.f32 %v863, %v875
    %v880 = vmul.f32 %v864, %v876
    %v881 = vmul.f32 %v865, %v877
    %v882 = vmul.f32 %v866, %v878
    %883 = vmatprep.subr.mxu0 0.0
    %884 = vmatpush1.msra.mxu0 %v879
    %885 = vmatprep.subr.mxu0 0.0
    %886 = vmatpush1.msra.mxu0 %v880
    %887 = vmatprep.subr.mxu0 0.0
    %888 = vmatpush1.msra.mxu0 %v881
    %889 = vmatprep.subr.mxu0 0.0
    %890 = vmatpush1.msra.mxu0 %v882
    %891 = vmatprep.subr.mxu0 0.0
    %892 = vmatpush1.msra.mxu0 0.0
    %893 = vmatprep.subr.mxu0 0.0
    %894 = vmatpush1.msra.mxu0 0.0
    %895 = vmatprep.subr.mxu0 0.0
    %896 = vmatpush1.msra.mxu0 0.0
    %897 = vmatprep.subr.mxu0 0.0
    %898 = vmatpush1.msra.mxu0 0.0
    %899 = vmatprep.subr.mxu0 0.0
    %900 = vmatpush1.msra.mxu0 0.0
    %901 = vmatprep.subr.mxu0 0.0
    %902 = vmatpush1.msra.mxu0 0.0
    %903 = vmatprep.subr.mxu0 0.0
    %904 = vmatpush1.msra.mxu0 0.0
    %905 = vmatprep.subr.mxu0 0.0
    %906 = vmatpush1.msra.mxu0 0.0
    %907 = vmatprep.subr.mxu0 0.0
    %908 = vmatpush1.msra.mxu0 0.0
    %909 = vmatprep.subr.mxu0 0.0
    %910 = vmatpush1.msra.mxu0 0.0
    %911 = vmatprep.subr.mxu0 0.0
    %912 = vmatpush1.msra.mxu0 0.0
    %913 = vmatprep.subr.mxu0 0.0
    %914 = vmatpush1.msra.mxu0 0.0
    %915 = vmatprep.subr.mxu0 0.0
    %916 = vmatpush1.msra.mxu0 0.0
    %917 = vmatprep.subr.mxu0 0.0
    %918 = vmatpush1.msra.mxu0 0.0
    %919 = vmatprep.subr.mxu0 0.0
    %920 = vmatpush1.msra.mxu0 0.0
    %921 = vmatprep.subr.mxu0 0.0
    %922 = vmatpush1.msra.mxu0 0.0
    %923 = vmatprep.subr.mxu0 0.0
    %924 = vmatpush1.msra.mxu0 0.0
    %925 = vmatprep.subr.mxu0 0.0
    %926 = vmatpush1.msra.mxu0 0.0
    %927 = vmatprep.subr.mxu0 0.0
    %928 = vmatpush1.msra.mxu0 0.0
    %929 = vmatprep.subr.mxu0 0.0
    %930 = vmatpush1.msra.mxu0 0.0
    %931 = vmatprep.subr.mxu0 0.0
    %932 = vmatpush1.msra.mxu0 0.0
    %933 = vmatprep.subr.mxu0 0.0
    %934 = vmatpush1.msra.mxu0 0.0
    %935 = vmatprep.subr.mxu0 0.0
    %936 = vmatpush1.msra.mxu0 0.0
    %937 = vmatprep.subr.mxu0 0.0
    %938 = vmatpush1.msra.mxu0 0.0
    %939 = vmatprep.subr.mxu0 0.0
    %940 = vmatpush1.msra.mxu0 0.0
    %941 = vmatprep.subr.mxu0 0.0
    %942 = vmatpush1.msra.mxu0 0.0
    %943 = vmatprep.subr.mxu0 0.0
    %944 = vmatpush1.msra.mxu0 0.0
    %945 = vmatprep.subr.mxu0 0.0
    %946 = vmatpush1.msra.mxu0 0.0
    %947 = vmatprep.mubr.f32.mxu0 0.0
    %948 = vmatmul.mubr.f32.gmra.mrb[0].mxu0 %v158
    %v949 = vpop.f32.mrb[0].mxu0
    %v950 = vadd.f32 0.0, %v949
    %v951 = vpop.f32.mrb[0].mxu0
    %952 = vmatprep.mubr.f32.mxu0 0.0
    %953 = vmatmul.mubr.f32.gmra.mrb[0].mxu0 %v161
    %v954 = vpop.f32.mrb[0].mxu0
    %v955 = vadd.f32 0.0, %v954
    %v956 = vpop.f32.mrb[0].mxu0
    %957 = vmatprep.mubr.f32.mxu0 0.0
    %958 = vmatmul.mubr.f32.gmra.mrb[0].mxu0 %v164
    %v959 = vpop.f32.mrb[0].mxu0
    %v960 = vadd.f32 0.0, %v959
    %v961 = vpop.f32.mrb[0].mxu0
    %962 = vmatprep.mubr.f32.mxu0 0.0
    %963 = vmatmul.mubr.f32.gmra.mrb[0].mxu0 %v167
    %v964 = vpop.f32.mrb[0].mxu0
    %v965 = vadd.f32 0.0, %v964
    %v966 = vpop.f32.mrb[0].mxu0
    %967 = vdwg.mxu0
    %968 = vmatprep.subr.mxu0 0.0
    %969 = vmatpush1.msra.mxu0 %v879
    %970 = vmatprep.subr.mxu0 0.0
    %971 = vmatpush1.msra.mxu0 %v880
    %972 = vmatprep.subr.mxu0 0.0
    %973 = vmatpush1.msra.mxu0 %v881
    %974 = vmatprep.subr.mxu0 0.0
    %975 = vmatpush1.msra.mxu0 %v882
    %976 = vmatprep.subr.mxu0 0.0
    %977 = vmatpush1.msra.mxu0 0.0
    %978 = vmatprep.subr.mxu0 0.0
    %979 = vmatpush1.msra.mxu0 0.0
    %980 = vmatprep.subr.mxu0 0.0
    %981 = vmatpush1.msra.mxu0 0.0
    %982 = vmatprep.subr.mxu0 0.0
    %983 = vmatpush1.msra.mxu0 0.0
    %984 = vmatprep.subr.mxu0 0.0
    %985 = vmatpush1.msra.mxu0 0.0
    %986 = vmatprep.subr.mxu0 0.0
    %987 = vmatpush1.msra.mxu0 0.0
    %988 = vmatprep.subr.mxu0 0.0
    %989 = vmatpush1.msra.mxu0 0.0
    %990 = vmatprep.subr.mxu0 0.0
    %991 = vmatpush1.msra.mxu0 0.0
    %992 = vmatprep.subr.mxu0 0.0
    %993 = vmatpush1.msra.mxu0 0.0
    %994 = vmatprep.subr.mxu0 0.0
    %995 = vmatpush1.msra.mxu0 0.0
    %996 = vmatprep.subr.mxu0 0.0
    %997 = vmatpush1.msra.mxu0 0.0
    %998 = vmatprep.subr.mxu0 0.0
    %999 = vmatpush1.msra.mxu0 0.0
    %1000 = vmatprep.subr.mxu0 0.0
    %1001 = vmatpush1.msra.mxu0 0.0
    %1002 = vmatprep.subr.mxu0 0.0
    %1003 = vmatpush1.msra.mxu0 0.0
    %1004 = vmatprep.subr.mxu0 0.0
    %1005 = vmatpush1.msra.mxu0 0.0
    %1006 = vmatprep.subr.mxu0 0.0
    %1007 = vmatpush1.msra.mxu0 0.0
    %1008 = vmatprep.subr.mxu0 0.0
    %1009 = vmatpush1.msra.mxu0 0.0
    %1010 = vmatprep.subr.mxu0 0.0
    %1011 = vmatpush1.msra.mxu0 0.0
    %1012 = vmatprep.subr.mxu0 0.0
    %1013 = vmatpush1.msra.mxu0 0.0
    %1014 = vmatprep.subr.mxu0 0.0
    %1015 = vmatpush1.msra.mxu0 0.0
    %1016 = vmatprep.subr.mxu0 0.0
    %1017 = vmatpush1.msra.mxu0 0.0
    %1018 = vmatprep.subr.mxu0 0.0
    %1019 = vmatpush1.msra.mxu0 0.0
    %1020 = vmatprep.subr.mxu0 0.0
    %1021 = vmatpush1.msra.mxu0 0.0
    %1022 = vmatprep.subr.mxu0 0.0
    %1023 = vmatpush1.msra.mxu0 0.0
    %1024 = vmatprep.subr.mxu0 0.0
    %1025 = vmatpush1.msra.mxu0 0.0
    %1026 = vmatprep.subr.mxu0 0.0
    %1027 = vmatpush1.msra.mxu0 0.0
    %1028 = vmatprep.subr.mxu0 0.0
    %1029 = vmatpush1.msra.mxu0 0.0
    %1030 = vmatprep.subr.mxu0 0.0
    %1031 = vmatpush1.msra.mxu0 0.0
    %1032 = vmatprep.mubr.f32.mxu0 0.0
    %1033 = vmatmul.mubr.f32.gmra.mrb[0].mxu0 %v255
    %v1034 = vpop.f32.mrb[0].mxu0
    %v1035 = vadd.f32 0.0, %v1034
    %v1036 = vpop.f32.mrb[0].mxu0
    %1037 = vmatprep.mubr.f32.mxu0 0.0
    %1038 = vmatmul.mubr.f32.gmra.mrb[0].mxu0 %v258
    %v1039 = vpop.f32.mrb[0].mxu0
    %v1040 = vadd.f32 0.0, %v1039
    %v1041 = vpop.f32.mrb[0].mxu0
    %1042 = vmatprep.mubr.f32.mxu0 0.0
    %1043 = vmatmul.mubr.f32.gmra.mrb[0].mxu0 %v261
    %v1044 = vpop.f32.mrb[0].mxu0
    %v1045 = vadd.f32 0.0, %v1044
    %v1046 = vpop.f32.mrb[0].mxu0
    %1047 = vmatprep.mubr.f32.mxu0 0.0
    %1048 = vmatmul.mubr.f32.gmra.mrb[0].mxu0 %v264
    %v1049 = vpop.f32.mrb[0].mxu0
    %v1050 = vadd.f32 0.0, %v1049
    %v1051 = vpop.f32.mrb[0].mxu0
    %1052 = vdwg.mxu0
    %v1053 = vld [vmem:[#allocation10] sm:$0xff]
    %v1054 = vld [vmem:[#allocation10 + $0x8] sm:$0xff]
    %v1055 = vld [vmem:[#allocation10 + $0x10] sm:$0xff]
    %v1056 = vld [vmem:[#allocation10 + $0x18] sm:$0xff]
    %v1057 = vld [vmem:[#allocation10 + $0x20] sm:$0xff]
    %v1058 = vld [vmem:[#allocation10 + $0x28] sm:$0xff]
    %v1059 = vld [vmem:[#allocation10 + $0x30] sm:$0xff]
    %v1060 = vld [vmem:[#allocation10 + $0x38] sm:$0xff]
    %v1061 = vld [vmem:[#allocation10 + $0x40] sm:$0xff]
    %v1062 = vld [vmem:[#allocation10 + $0x48] sm:$0xff]
    %v1063 = vld [vmem:[#allocation10 + $0x50] sm:$0xff]
    %v1064 = vld [vmem:[#allocation10 + $0x58] sm:$0xff]
    %v1065 = vld [vmem:[#allocation10 + $0x60] sm:$0xff]
    %v1066 = vld [vmem:[#allocation10 + $0x68] sm:$0xff]
    %v1067 = vld [vmem:[#allocation10 + $0x70] sm:$0xff]
    %v1068 = vld [vmem:[#allocation10 + $0x78] sm:$0xff]
    %s1069 = scalar_lea.vmem [#allocation10], 128
    %v1070 = vld [vmem:[%s1069] sm:$0xff]
    %v1071 = vld [vmem:[%s1069 + $0x8] sm:$0xff]
    %v1072 = vld [vmem:[%s1069 + $0x10] sm:$0xff]
    %v1073 = vld [vmem:[%s1069 + $0x18] sm:$0xff]
    %v1074 = vld [vmem:[%s1069 + $0x20] sm:$0xff]
    %v1075 = vld [vmem:[%s1069 + $0x28] sm:$0xff]
    %v1076 = vld [vmem:[%s1069 + $0x30] sm:$0xff]
    %v1077 = vld [vmem:[%s1069 + $0x38] sm:$0xff]
    %v1078 = vld [vmem:[%s1069 + $0x40] sm:$0xff]
    %v1079 = vld [vmem:[%s1069 + $0x48] sm:$0xff]
    %v1080 = vld [vmem:[%s1069 + $0x50] sm:$0xff]
    %v1081 = vld [vmem:[%s1069 + $0x58] sm:$0xff]
    %v1082 = vld [vmem:[%s1069 + $0x60] sm:$0xff]
    %v1083 = vld [vmem:[%s1069 + $0x68] sm:$0xff]
    %v1084 = vld [vmem:[%s1069 + $0x70] sm:$0xff]
    %v1085 = vld [vmem:[%s1069 + $0x78] sm:$0xff]
    %1086 = vmatprep.subr.mxu0 0.0
    %1087 = vmatpush1.msra.mxu0 %v1070
    %1088 = vmatprep.subr.mxu0 0.0
    %1089 = vmatpush1.msra.mxu0 %v1071
    %1090 = vmatprep.subr.mxu0 0.0
    %1091 = vmatpush1.msra.mxu0 %v1072
    %1092 = vmatprep.subr.mxu0 0.0
    %1093 = vmatpush1.msra.mxu0 %v1073
    %1094 = vmatprep.subr.mxu0 0.0
    %1095 = vmatpush1.msra.mxu0 %v1074
    %1096 = vmatprep.subr.mxu0 0.0
    %1097 = vmatpush1.msra.mxu0 %v1075
    %1098 = vmatprep.subr.mxu0 0.0
    %1099 = vmatpush1.msra.mxu0 %v1076
    %1100 = vmatprep.subr.mxu0 0.0
    %1101 = vmatpush1.msra.mxu0 %v1077
    %1102 = vmatprep.subr.mxu0 0.0
    %1103 = vmatpush1.msra.mxu0 %v1078
    %1104 = vmatprep.subr.mxu0 0.0
    %1105 = vmatpush1.msra.mxu0 %v1079
    %1106 = vmatprep.subr.mxu0 0.0
    %1107 = vmatpush1.msra.mxu0 %v1080
    %1108 = vmatprep.subr.mxu0 0.0
    %1109 = vmatpush1.msra.mxu0 %v1081
    %1110 = vmatprep.subr.mxu0 0.0
    %1111 = vmatpush1.msra.mxu0 %v1082
    %1112 = vmatprep.subr.mxu0 0.0
    %1113 = vmatpush1.msra.mxu0 %v1083
    %1114 = vmatprep.subr.mxu0 0.0
    %1115 = vmatpush1.msra.mxu0 %v1084
    %1116 = vmatprep.subr.mxu0 0.0
    %1117 = vmatpush1.msra.mxu0 %v1085
    %1118 = vmatprep.subr.mxu0 0.0
    %1119 = vmatpush1.msra.mxu0 0.0
    %1120 = vmatprep.subr.mxu0 0.0
    %1121 = vmatpush1.msra.mxu0 0.0
    %1122 = vmatprep.subr.mxu0 0.0
    %1123 = vmatpush1.msra.mxu0 0.0
    %1124 = vmatprep.subr.mxu0 0.0
    %1125 = vmatpush1.msra.mxu0 0.0
    %1126 = vmatprep.subr.mxu0 0.0
    %1127 = vmatpush1.msra.mxu0 0.0
    %1128 = vmatprep.subr.mxu0 0.0
    %1129 = vmatpush1.msra.mxu0 0.0
    %1130 = vmatprep.subr.mxu0 0.0
    %1131 = vmatpush1.msra.mxu0 0.0
    %1132 = vmatprep.subr.mxu0 0.0
    %1133 = vmatpush1.msra.mxu0 0.0
    %1134 = vmatprep.subr.mxu0 0.0
    %1135 = vmatpush1.msra.mxu0 0.0
    %1136 = vmatprep.subr.mxu0 0.0
    %1137 = vmatpush1.msra.mxu0 0.0
    %1138 = vmatprep.subr.mxu0 0.0
    %1139 = vmatpush1.msra.mxu0 0.0
    %1140 = vmatprep.subr.mxu0 0.0
    %1141 = vmatpush1.msra.mxu0 0.0
    %1142 = vmatprep.subr.mxu0 0.0
    %1143 = vmatpush1.msra.mxu0 0.0
    %1144 = vmatprep.subr.mxu0 0.0
    %1145 = vmatpush1.msra.mxu0 0.0
    %1146 = vmatprep.subr.mxu0 0.0
    %1147 = vmatpush1.msra.mxu0 0.0
    %1148 = vmatprep.subr.mxu0 0.0
    %1149 = vmatpush1.msra.mxu0 0.0
    %1150 = vmatprep.mubr.f32.mxu0 0.0
    %1151 = vmatmul.mubr.f32.gmra.mrb[0].mxu0 %v879
    %v1152 = vpop.f32.mrb[0].mxu0
    %v1153 = vadd.f32 0.0, %v1152
    %v1154 = vpop.f32.mrb[0].mxu0
    %1155 = vmatprep.mubr.f32.mxu0 0.0
    %1156 = vmatmul.mubr.f32.gmra.mrb[0].mxu0 %v880
    %v1157 = vpop.f32.mrb[0].mxu0
    %v1158 = vadd.f32 0.0, %v1157
    %v1159 = vpop.f32.mrb[0].mxu0
    %1160 = vmatprep.mubr.f32.mxu0 0.0
    %1161 = vmatmul.mubr.f32.gmra.mrb[0].mxu0 %v881
    %v1162 = vpop.f32.mrb[0].mxu0
    %v1163 = vadd.f32 0.0, %v1162
    %v1164 = vpop.f32.mrb[0].mxu0
    %1165 = vmatprep.mubr.f32.mxu0 0.0
    %1166 = vmatmul.mubr.f32.gmra.mrb[0].mxu0 %v882
    %v1167 = vpop.f32.mrb[0].mxu0
    %v1168 = vadd.f32 0.0, %v1167
    %v1169 = vpop.f32.mrb[0].mxu0
    %1170 = vdwg.mxu0
    %1171 = vmatprep.subr.mxu0 0.0
    %1172 = vmatpush1.msra.mxu0 %v1053
    %1173 = vmatprep.subr.mxu0 0.0
    %1174 = vmatpush1.msra.mxu0 %v1054
    %1175 = vmatprep.subr.mxu0 0.0
    %1176 = vmatpush1.msra.mxu0 %v1055
    %1177 = vmatprep.subr.mxu0 0.0
    %1178 = vmatpush1.msra.mxu0 %v1056
    %1179 = vmatprep.subr.mxu0 0.0
    %1180 = vmatpush1.msra.mxu0 %v1057
    %1181 = vmatprep.subr.mxu0 0.0
    %1182 = vmatpush1.msra.mxu0 %v1058
    %1183 = vmatprep.subr.mxu0 0.0
    %1184 = vmatpush1.msra.mxu0 %v1059
    %1185 = vmatprep.subr.mxu0 0.0
    %1186 = vmatpush1.msra.mxu0 %v1060
    %1187 = vmatprep.subr.mxu0 0.0
    %1188 = vmatpush1.msra.mxu0 %v1061
    %1189 = vmatprep.subr.mxu0 0.0
    %1190 = vmatpush1.msra.mxu0 %v1062
    %1191 = vmatprep.subr.mxu0 0.0
    %1192 = vmatpush1.msra.mxu0 %v1063
    %1193 = vmatprep.subr.mxu0 0.0
    %1194 = vmatpush1.msra.mxu0 %v1064
    %1195 = vmatprep.subr.mxu0 0.0
    %1196 = vmatpush1.msra.mxu0 %v1065
    %1197 = vmatprep.subr.mxu0 0.0
    %1198 = vmatpush1.msra.mxu0 %v1066
    %1199 = vmatprep.subr.mxu0 0.0
    %1200 = vmatpush1.msra.mxu0 %v1067
    %1201 = vmatprep.subr.mxu0 0.0
    %1202 = vmatpush1.msra.mxu0 %v1068
    %1203 = vmatprep.subr.mxu0 0.0
    %1204 = vmatpush1.msra.mxu0 0.0
    %1205 = vmatprep.subr.mxu0 0.0
    %1206 = vmatpush1.msra.mxu0 0.0
    %1207 = vmatprep.subr.mxu0 0.0
    %1208 = vmatpush1.msra.mxu0 0.0
    %1209 = vmatprep.subr.mxu0 0.0
    %1210 = vmatpush1.msra.mxu0 0.0
    %1211 = vmatprep.subr.mxu0 0.0
    %1212 = vmatpush1.msra.mxu0 0.0
    %1213 = vmatprep.subr.mxu0 0.0
    %1214 = vmatpush1.msra.mxu0 0.0
    %1215 = vmatprep.subr.mxu0 0.0
    %1216 = vmatpush1.msra.mxu0 0.0
    %1217 = vmatprep.subr.mxu0 0.0
    %1218 = vmatpush1.msra.mxu0 0.0
    %1219 = vmatprep.subr.mxu0 0.0
    %1220 = vmatpush1.msra.mxu0 0.0
    %1221 = vmatprep.subr.mxu0 0.0
    %1222 = vmatpush1.msra.mxu0 0.0
    %1223 = vmatprep.subr.mxu0 0.0
    %1224 = vmatpush1.msra.mxu0 0.0
    %1225 = vmatprep.subr.mxu0 0.0
    %1226 = vmatpush1.msra.mxu0 0.0
    %1227 = vmatprep.subr.mxu0 0.0
    %1228 = vmatpush1.msra.mxu0 0.0
    %1229 = vmatprep.subr.mxu0 0.0
    %1230 = vmatpush1.msra.mxu0 0.0
    %1231 = vmatprep.subr.mxu0 0.0
    %1232 = vmatpush1.msra.mxu0 0.0
    %1233 = vmatprep.subr.mxu0 0.0
    %1234 = vmatpush1.msra.mxu0 0.0
    %1235 = vmatprep.mubr.f32.mxu0 0.0
    %1236 = vmatmul.mubr.f32.gmra.mrb[0].mxu0 %v950
    %v1237 = vpop.f32.mrb[0].mxu0
    %v1238 = vadd.f32 %v1153, %v1237
    %v1239 = vpop.f32.mrb[0].mxu0
    %1240 = vmatprep.mubr.f32.mxu0 0.0
    %1241 = vmatmul.mubr.f32.gmra.mrb[0].mxu0 %v955
    %v1242 = vpop.f32.mrb[0].mxu0
    %v1243 = vadd.f32 %v1158, %v1242
    %v1244 = vpop.f32.mrb[0].mxu0
    %1245 = vmatprep.mubr.f32.mxu0 0.0
    %1246 = vmatmul.mubr.f32.gmra.mrb[0].mxu0 %v960
    %v1247 = vpop.f32.mrb[0].mxu0
    %v1248 = vadd.f32 %v1163, %v1247
    %v1249 = vpop.f32.mrb[0].mxu0
    %1250 = vmatprep.mubr.f32.mxu0 0.0
    %1251 = vmatmul.mubr.f32.gmra.mrb[0].mxu0 %v965
    %v1252 = vpop.f32.mrb[0].mxu0
    %v1253 = vadd.f32 %v1168, %v1252
    %v1254 = vpop.f32.mrb[0].mxu0
    %1255 = vdwg.mxu0
    %s1256 = scalar_lea.vmem [#allocation10], 256
    %v1257 = vld [vmem:[%s1256] sm:$0xff]
    %v1258 = vld [vmem:[%s1256 + $0x8] sm:$0xff]
    %v1259 = vld [vmem:[%s1256 + $0x10] sm:$0xff]
    %v1260 = vld [vmem:[%s1256 + $0x18] sm:$0xff]
    %v1261 = vld [vmem:[%s1256 + $0x20] sm:$0xff]
    %v1262 = vld [vmem:[%s1256 + $0x28] sm:$0xff]
    %v1263 = vld [vmem:[%s1256 + $0x30] sm:$0xff]
    %v1264 = vld [vmem:[%s1256 + $0x38] sm:$0xff]
    %v1265 = vld [vmem:[%s1256 + $0x40] sm:$0xff]
    %v1266 = vld [vmem:[%s1256 + $0x48] sm:$0xff]
    %v1267 = vld [vmem:[%s1256 + $0x50] sm:$0xff]
    %v1268 = vld [vmem:[%s1256 + $0x58] sm:$0xff]
    %v1269 = vld [vmem:[%s1256 + $0x60] sm:$0xff]
    %v1270 = vld [vmem:[%s1256 + $0x68] sm:$0xff]
    %v1271 = vld [vmem:[%s1256 + $0x70] sm:$0xff]
    %v1272 = vld [vmem:[%s1256 + $0x78] sm:$0xff]
    %1273 = vmatprep.subr.mxu0 0.0
    %1274 = vmatpush1.msra.mxu0 %v1257
    %1275 = vmatprep.subr.mxu0 0.0
    %1276 = vmatpush1.msra.mxu0 %v1258
    %1277 = vmatprep.subr.mxu0 0.0
    %1278 = vmatpush1.msra.mxu0 %v1259
    %1279 = vmatprep.subr.mxu0 0.0
    %1280 = vmatpush1.msra.mxu0 %v1260
    %1281 = vmatprep.subr.mxu0 0.0
    %1282 = vmatpush1.msra.mxu0 %v1261
    %1283 = vmatprep.subr.mxu0 0.0
    %1284 = vmatpush1.msra.mxu0 %v1262
    %1285 = vmatprep.subr.mxu0 0.0
    %1286 = vmatpush1.msra.mxu0 %v1263
    %1287 = vmatprep.subr.mxu0 0.0
    %1288 = vmatpush1.msra.mxu0 %v1264
    %1289 = vmatprep.subr.mxu0 0.0
    %1290 = vmatpush1.msra.mxu0 %v1265
    %1291 = vmatprep.subr.mxu0 0.0
    %1292 = vmatpush1.msra.mxu0 %v1266
    %1293 = vmatprep.subr.mxu0 0.0
    %1294 = vmatpush1.msra.mxu0 %v1267
    %1295 = vmatprep.subr.mxu0 0.0
    %1296 = vmatpush1.msra.mxu0 %v1268
    %1297 = vmatprep.subr.mxu0 0.0
    %1298 = vmatpush1.msra.mxu0 %v1269
    %1299 = vmatprep.subr.mxu0 0.0
    %1300 = vmatpush1.msra.mxu0 %v1270
    %1301 = vmatprep.subr.mxu0 0.0
    %1302 = vmatpush1.msra.mxu0 %v1271
    %1303 = vmatprep.subr.mxu0 0.0
    %1304 = vmatpush1.msra.mxu0 %v1272
    %1305 = vmatprep.subr.mxu0 0.0
    %1306 = vmatpush1.msra.mxu0 0.0
    %1307 = vmatprep.subr.mxu0 0.0
    %1308 = vmatpush1.msra.mxu0 0.0
    %1309 = vmatprep.subr.mxu0 0.0
    %1310 = vmatpush1.msra.mxu0 0.0
    %1311 = vmatprep.subr.mxu0 0.0
    %1312 = vmatpush1.msra.mxu0 0.0
    %1313 = vmatprep.subr.mxu0 0.0
    %1314 = vmatpush1.msra.mxu0 0.0
    %1315 = vmatprep.subr.mxu0 0.0
    %1316 = vmatpush1.msra.mxu0 0.0
    %1317 = vmatprep.subr.mxu0 0.0
    %1318 = vmatpush1.msra.mxu0 0.0
    %1319 = vmatprep.subr.mxu0 0.0
    %1320 = vmatpush1.msra.mxu0 0.0
    %1321 = vmatprep.subr.mxu0 0.0
    %1322 = vmatpush1.msra.mxu0 0.0
    %1323 = vmatprep.subr.mxu0 0.0
    %1324 = vmatpush1.msra.mxu0 0.0
    %1325 = vmatprep.subr.mxu0 0.0
    %1326 = vmatpush1.msra.mxu0 0.0
    %1327 = vmatprep.subr.mxu0 0.0
    %1328 = vmatpush1.msra.mxu0 0.0
    %1329 = vmatprep.subr.mxu0 0.0
    %1330 = vmatpush1.msra.mxu0 0.0
    %1331 = vmatprep.subr.mxu0 0.0
    %1332 = vmatpush1.msra.mxu0 0.0
    %1333 = vmatprep.subr.mxu0 0.0
    %1334 = vmatpush1.msra.mxu0 0.0
    %1335 = vmatprep.subr.mxu0 0.0
    %1336 = vmatpush1.msra.mxu0 0.0
    %1337 = vmatprep.mubr.f32.mxu0 0.0
    %1338 = vmatmul.mubr.f32.gmra.mrb[0].mxu0 %v1035
    %v1339 = vpop.f32.mrb[0].mxu0
    %v1340 = vadd.f32 0.0, %v1339
    %v1341 = vpop.f32.mrb[0].mxu0
    %1342 = vmatprep.mubr.f32.mxu0 0.0
    %1343 = vmatmul.mubr.f32.gmra.mrb[0].mxu0 %v1040
    %v1344 = vpop.f32.mrb[0].mxu0
    %v1345 = vadd.f32 0.0, %v1344
    %v1346 = vpop.f32.mrb[0].mxu0
    %1347 = vmatprep.mubr.f32.mxu0 0.0
    %1348 = vmatmul.mubr.f32.gmra.mrb[0].mxu0 %v1045
    %v1349 = vpop.f32.mrb[0].mxu0
    %v1350 = vadd.f32 0.0, %v1349
    %v1351 = vpop.f32.mrb[0].mxu0
    %1352 = vmatprep.mubr.f32.mxu0 0.0
    %1353 = vmatmul.mubr.f32.gmra.mrb[0].mxu0 %v1050
    %v1354 = vpop.f32.mrb[0].mxu0
    %v1355 = vadd.f32 0.0, %v1354
    %v1356 = vpop.f32.mrb[0].mxu0
    %1357 = vdwg.mxu0
    %v1358 = vadd.f32 %v1238, %v1340
    %v1359 = vadd.f32 %v1243, %v1345
    %v1360 = vadd.f32 %v1248, %v1350
    %v1361 = vadd.f32 %v1253, %v1355
    %v1362 = vadd.f32 %v1358, %v1359
    %v1363 = vadd.f32 %v1362, %v1360
    %v1364 = vadd.f32 %v1363, %v1361
    %v1365 = vrot.slane %v1364, 4
    %v1366 = vadd.f32 %v1364, %v1365
    %v1367 = vrot.slane %v1366, 2
    %v1368 = vadd.f32 %v1366, %v1367
    %v1369 = vrot.slane %v1368, 1
    %v1370 = vadd.f32 %v1368, %v1369
    %v1371 = vmul.f32 %v1358, %v1358
    %v1372 = vmul.f32 %v1359, %v1359
    %v1373 = vmul.f32 %v1360, %v1360
    %v1374 = vmul.f32 %v1361, %v1361
    %v1375 = vadd.f32 %v1371, %v1372
    %v1376 = vadd.f32 %v1375, %v1373
    %v1377 = vadd.f32 %v1376, %v1374
    %v1378 = vrot.slane %v1377, 4
    %v1379 = vadd.f32 %v1377, %v1378
    %v1380 = vrot.slane %v1379, 2
    %v1381 = vadd.f32 %v1379, %v1380
    %v1382 = vrot.slane %v1381, 1
    %v1383 = vadd.f32 %v1381, %v1382
    %1384 = vmatprep.subr.mxu0 0.0
    %1385 = vmatpush1.msra.mxu0 %v140
    %1386 = vmatprep.subr.mxu0 0.0
    %1387 = vmatpush1.msra.mxu0 %v141
    %1388 = vmatprep.subr.mxu0 0.0
    %1389 = vmatpush1.msra.mxu0 %v142
    %1390 = vmatprep.subr.mxu0 0.0
    %1391 = vmatpush1.msra.mxu0 %v143
    %1392 = vmatprep.subr.mxu0 0.0
    %1393 = vmatpush1.msra.mxu0 %v144
    %1394 = vmatprep.subr.mxu0 0.0
    %1395 = vmatpush1.msra.mxu0 %v145
    %1396 = vmatprep.subr.mxu0 0.0
    %1397 = vmatpush1.msra.mxu0 %v146
    %1398 = vmatprep.subr.mxu0 0.0
    %1399 = vmatpush1.msra.mxu0 %v147
    %1400 = vmatprep.subr.mxu0 0.0
    %1401 = vmatpush1.msra.mxu0 %v148
    %1402 = vmatprep.subr.mxu0 0.0
    %1403 = vmatpush1.msra.mxu0 %v149
    %1404 = vmatprep.subr.mxu0 0.0
    %1405 = vmatpush1.msra.mxu0 %v150
    %1406 = vmatprep.subr.mxu0 0.0
    %1407 = vmatpush1.msra.mxu0 %v151
    %1408 = vmatprep.subr.mxu0 0.0
    %1409 = vmatpush1.msra.mxu0 %v152
    %1410 = vmatprep.subr.mxu0 0.0
    %1411 = vmatpush1.msra.mxu0 %v153
    %1412 = vmatprep.subr.mxu0 0.0
    %1413 = vmatpush1.msra.mxu0 %v154
    %1414 = vmatprep.subr.mxu0 0.0
    %1415 = vmatpush1.msra.mxu0 %v155
    %1416 = vmatprep.subr.mxu0 0.0
    %1417 = vmatpush1.msra.mxu0 0.0
    %1418 = vmatprep.subr.mxu0 0.0
    %1419 = vmatpush1.msra.mxu0 0.0
    %1420 = vmatprep.subr.mxu0 0.0
    %1421 = vmatpush1.msra.mxu0 0.0
    %1422 = vmatprep.subr.mxu0 0.0
    %1423 = vmatpush1.msra.mxu0 0.0
    %1424 = vmatprep.subr.mxu0 0.0
    %1425 = vmatpush1.msra.mxu0 0.0
    %1426 = vmatprep.subr.mxu0 0.0
    %1427 = vmatpush1.msra.mxu0 0.0
    %1428 = vmatprep.subr.mxu0 0.0
    %1429 = vmatpush1.msra.mxu0 0.0
    %1430 = vmatprep.subr.mxu0 0.0
    %1431 = vmatpush1.msra.mxu0 0.0
    %1432 = vmatprep.subr.mxu0 0.0
    %1433 = vmatpush1.msra.mxu0 0.0
    %1434 = vmatprep.subr.mxu0 0.0
    %1435 = vmatpush1.msra.mxu0 0.0
    %1436 = vmatprep.subr.mxu0 0.0
    %1437 = vmatpush1.msra.mxu0 0.0
    %1438 = vmatprep.subr.mxu0 0.0
    %1439 = vmatpush1.msra.mxu0 0.0
    %1440 = vmatprep.subr.mxu0 0.0
    %1441 = vmatpush1.msra.mxu0 0.0
    %1442 = vmatprep.subr.mxu0 0.0
    %1443 = vmatpush1.msra.mxu0 0.0
    %1444 = vmatprep.subr.mxu0 0.0
    %1445 = vmatpush1.msra.mxu0 0.0
    %1446 = vmatprep.subr.mxu0 0.0
    %1447 = vmatpush1.msra.mxu0 0.0
    %1448 = vmatprep.mubr.f32.mxu0 0.0
    %1449 = vmatmul.mubr.f32.gmra.mrb[0].mxu0 %v1370
    %v1450 = vpop.f32.mrb[0].mxu0
    %v1451 = vadd.f32 0.0, %v1450
    %v1452 = vpop.f32.mrb[0].mxu0
    %1453 = vdwg.mxu0
    %v1454 = vmul.f32 %v1451, 0.001953125
    %1455 = vmatprep.subr.mxu0 0.0
    %1456 = vmatpush1.msra.mxu0 %v140
    %1457 = vmatprep.subr.mxu0 0.0
    %1458 = vmatpush1.msra.mxu0 %v141
    %1459 = vmatprep.subr.mxu0 0.0
    %1460 = vmatpush1.msra.mxu0 %v142
    %1461 = vmatprep.subr.mxu0 0.0
    %1462 = vmatpush1.msra.mxu0 %v143
    %1463 = vmatprep.subr.mxu0 0.0
    %1464 = vmatpush1.msra.mxu0 %v144
    %1465 = vmatprep.subr.mxu0 0.0
    %1466 = vmatpush1.msra.mxu0 %v145
    %1467 = vmatprep.subr.mxu0 0.0
    %1468 = vmatpush1.msra.mxu0 %v146
    %1469 = vmatprep.subr.mxu0 0.0
    %1470 = vmatpush1.msra.mxu0 %v147
    %1471 = vmatprep.subr.mxu0 0.0
    %1472 = vmatpush1.msra.mxu0 %v148
    %1473 = vmatprep.subr.mxu0 0.0
    %1474 = vmatpush1.msra.mxu0 %v149
    %1475 = vmatprep.subr.mxu0 0.0
    %1476 = vmatpush1.msra.mxu0 %v150
    %1477 = vmatprep.subr.mxu0 0.0
    %1478 = vmatpush1.msra.mxu0 %v151
    %1479 = vmatprep.subr.mxu0 0.0
    %1480 = vmatpush1.msra.mxu0 %v152
    %1481 = vmatprep.subr.mxu0 0.0
    %1482 = vmatpush1.msra.mxu0 %v153
    %1483 = vmatprep.subr.mxu0 0.0
    %1484 = vmatpush1.msra.mxu0 %v154
    %1485 = vmatprep.subr.mxu0 0.0
    %1486 = vmatpush1.msra.mxu0 %v155
    %1487 = vmatprep.subr.mxu0 0.0
    %1488 = vmatpush1.msra.mxu0 0.0
    %1489 = vmatprep.subr.mxu0 0.0
    %1490 = vmatpush1.msra.mxu0 0.0
    %1491 = vmatprep.subr.mxu0 0.0
    %1492 = vmatpush1.msra.mxu0 0.0
    %1493 = vmatprep.subr.mxu0 0.0
    %1494 = vmatpush1.msra.mxu0 0.0
    %1495 = vmatprep.subr.mxu0 0.0
    %1496 = vmatpush1.msra.mxu0 0.0
    %1497 = vmatprep.subr.mxu0 0.0
    %1498 = vmatpush1.msra.mxu0 0.0
    %1499 = vmatprep.subr.mxu0 0.0
    %1500 = vmatpush1.msra.mxu0 0.0
    %1501 = vmatprep.subr.mxu0 0.0
    %1502 = vmatpush1.msra.mxu0 0.0
    %1503 = vmatprep.subr.mxu0 0.0
    %1504 = vmatpush1.msra.mxu0 0.0
    %1505 = vmatprep.subr.mxu0 0.0
    %1506 = vmatpush1.msra.mxu0 0.0
    %1507 = vmatprep.subr.mxu0 0.0
    %1508 = vmatpush1.msra.mxu0 0.0
    %1509 = vmatprep.subr.mxu0 0.0
    %1510 = vmatpush1.msra.mxu0 0.0
    %1511 = vmatprep.subr.mxu0 0.0
    %1512 = vmatpush1.msra.mxu0 0.0
    %1513 = vmatprep.subr.mxu0 0.0
    %1514 = vmatpush1.msra.mxu0 0.0
    %1515 = vmatprep.subr.mxu0 0.0
    %1516 = vmatpush1.msra.mxu0 0.0
    %1517 = vmatprep.subr.mxu0 0.0
    %1518 = vmatpush1.msra.mxu0 0.0
    %1519 = vmatprep.mubr.f32.mxu0 0.0
    %1520 = vmatmul.mubr.f32.gmra.mrb[0].mxu0 %v1383
    %v1521 = vpop.f32.mrb[0].mxu0
    %v1522 = vadd.f32 0.0, %v1521
    %v1523 = vpop.f32.mrb[0].mxu0
    %1524 = vdwg.mxu0
    %v1525 = vmul.f32 %v1522, 0.001953125
    %v1526 = vmul.f32 %v1454, %v1454
    %v1527 = vsub.f32 %v1525, %v1526
    %v1528 = vmax.f32 %v1527, 0.0
    %v1529 = vld [vmem:[%s7 + $0x1] sm:$0x1]
    %v1530 = vadd.f32 %v1528, 1e-05
    %v1531 = vrsqrt.pop %v1530
    %v1532 = vmul.f32 %v1529, %v1531
    %v1533 = vld [vmem:[%s8 + $0x1] sm:$0x1]
    %v1534 = vmul.f32 %v1454, %v1532
    %v1535 = vsub.f32 %v1533, %v1534
    %v1536 = vlaneseq
    %v1537 = vshrl.u32 %v1536, 7
    %v1538 = vsub.s32 0, %v1537
    %v1539 = vrot.slane %v1532, %v1538
    %v1540 = vmul.f32 %v1358, %v1539
    %v1541 = vmul.f32 %v1359, %v1539
    %v1542 = vmul.f32 %v1360, %v1539
    %v1543 = vmul.f32 %v1361, %v1539
    %v1544 = vlaneseq
    %v1545 = vshrl.u32 %v1544, 7
    %v1546 = vsub.s32 0, %v1545
    %v1547 = vrot.slane %v1535, %v1546
    %v1548 = vadd.f32 %v1540, %v1547
    %v1549 = vadd.f32 %v1541, %v1547
    %v1550 = vadd.f32 %v1542, %v1547
    %v1551 = vadd.f32 %v1543, %v1547
    %v1552 = vmul.f32 %v1548, 0.5
    %v1553 = vmul.f32 %v1549, 0.5
    %v1554 = vmul.f32 %v1550, 0.5
    %v1555 = vmul.f32 %v1551, 0.5
    %v1556 = vmul.f32 %v1548, 0.70710677
    %v1557 = vmul.f32 %v1549, 0.70710677
    %v1558 = vmul.f32 %v1550, 0.70710677
    %v1559 = vmul.f32 %v1551, 0.70710677
    %v1560 = verf.f32.pop %v1556
    %v1561 = verf.f32.pop %v1557
    %v1562 = verf.f32.pop %v1558
    %v1563 = verf.f32.pop %v1559
    %v1564 = vadd.f32 %v1560, 1.0
    %v1565 = vadd.f32 %v1561, 1.0
    %v1566 = vadd.f32 %v1562, 1.0
    %v1567 = vadd.f32 %v1563, 1.0
    %v1568 = vmul.f32 %v1552, %v1564
    %v1569 = vmul.f32 %v1553, %v1565
    %v1570 = vmul.f32 %v1554, %v1566
    %v1571 = vmul.f32 %v1555, %v1567
    %v1572 = vld [vmem:[#allocation11] sm:$0xff]
    %v1573 = vld [vmem:[#allocation11 + $0x8] sm:$0xff]
    %v1574 = vld [vmem:[#allocation11 + $0x10] sm:$0xff]
    %v1575 = vld [vmem:[#allocation11 + $0x18] sm:$0xff]
    %v1576 = vld [vmem:[#allocation11 + $0x20] sm:$0xff]
    %v1577 = vld [vmem:[#allocation11 + $0x28] sm:$0xff]
    %v1578 = vld [vmem:[#allocation11 + $0x30] sm:$0xff]
    %v1579 = vld [vmem:[#allocation11 + $0x38] sm:$0xff]
    %1580 = vmatprep.subr.mxu0 0.0
    %1581 = vmatpush1.msra.mxu0 %v1572
    %1582 = vmatprep.subr.mxu0 0.0
    %1583 = vmatpush1.msra.mxu0 %v1573
    %1584 = vmatprep.subr.mxu0 0.0
    %1585 = vmatpush1.msra.mxu0 %v1574
    %1586 = vmatprep.subr.mxu0 0.0
    %1587 = vmatpush1.msra.mxu0 %v1575
    %1588 = vmatprep.subr.mxu0 0.0
    %1589 = vmatpush1.msra.mxu0 %v1576
    %1590 = vmatprep.subr.mxu0 0.0
    %1591 = vmatpush1.msra.mxu0 %v1577
    %1592 = vmatprep.subr.mxu0 0.0
    %1593 = vmatpush1.msra.mxu0 %v1578
    %1594 = vmatprep.subr.mxu0 0.0
    %1595 = vmatpush1.msra.mxu0 %v1579
    %1596 = vmatprep.subr.mxu0 0.0
    %1597 = vmatpush1.msra.mxu0 0.0
    %1598 = vmatprep.subr.mxu0 0.0
    %1599 = vmatpush1.msra.mxu0 0.0
    %1600 = vmatprep.subr.mxu0 0.0
    %1601 = vmatpush1.msra.mxu0 0.0
    %1602 = vmatprep.subr.mxu0 0.0
    %1603 = vmatpush1.msra.mxu0 0.0
    %1604 = vmatprep.subr.mxu0 0.0
    %1605 = vmatpush1.msra.mxu0 0.0
    %1606 = vmatprep.subr.mxu0 0.0
    %1607 = vmatpush1.msra.mxu0 0.0
    %1608 = vmatprep.subr.mxu0 0.0
    %1609 = vmatpush1.msra.mxu0 0.0
    %1610 = vmatprep.subr.mxu0 0.0
    %1611 = vmatpush1.msra.mxu0 0.0
    %1612 = vmatprep.subr.mxu0 0.0
    %1613 = vmatpush1.msra.mxu0 0.0
    %1614 = vmatprep.subr.mxu0 0.0
    %1615 = vmatpush1.msra.mxu0 0.0
    %1616 = vmatprep.subr.mxu0 0.0
    %1617 = vmatpush1.msra.mxu0 0.0
    %1618 = vmatprep.subr.mxu0 0.0
    %1619 = vmatpush1.msra.mxu0 0.0
    %1620 = vmatprep.subr.mxu0 0.0
    %1621 = vmatpush1.msra.mxu0 0.0
    %1622 = vmatprep.subr.mxu0 0.0
    %1623 = vmatpush1.msra.mxu0 0.0
    %1624 = vmatprep.subr.mxu0 0.0
    %1625 = vmatpush1.msra.mxu0 0.0
    %1626 = vmatprep.subr.mxu0 0.0
    %1627 = vmatpush1.msra.mxu0 0.0
    %1628 = vmatprep.subr.mxu0 0.0
    %1629 = vmatpush1.msra.mxu0 0.0
    %1630 = vmatprep.subr.mxu0 0.0
    %1631 = vmatpush1.msra.mxu0 0.0
    %1632 = vmatprep.subr.mxu0 0.0
    %1633 = vmatpush1.msra.mxu0 0.0
    %1634 = vmatprep.subr.mxu0 0.0
    %1635 = vmatpush1.msra.mxu0 0.0
    %1636 = vmatprep.subr.mxu0 0.0
    %1637 = vmatpush1.msra.mxu0 0.0
    %1638 = vmatprep.subr.mxu0 0.0
    %1639 = vmatpush1.msra.mxu0 0.0
    %1640 = vmatprep.subr.mxu0 0.0
    %1641 = vmatpush1.msra.mxu0 0.0
    %1642 = vmatprep.subr.mxu0 0.0
    %1643 = vmatpush1.msra.mxu0 0.0
    %1644 = vmatprep.mubr.f32.mxu0 0.0
    %1645 = vmatmul.mubr.f32.gmra.mrb[0].mxu0 %v370
    %v1646 = vpop.f32.mrb[0].mxu0
    %v1647 = vadd.f32 0.0, %v1646
    %v1648 = vpop.f32.mrb[0].mxu0
    %1649 = vmatprep.mubr.f32.mxu0 0.0
    %1650 = vmatmul.mubr.f32.gmra.mrb[0].mxu0 %v373
    %v1651 = vpop.f32.mrb[0].mxu0
    %v1652 = vadd.f32 0.0, %v1651
    %v1653 = vpop.f32.mrb[0].mxu0
    %1654 = vmatprep.mubr.f32.mxu0 0.0
    %1655 = vmatmul.mubr.f32.gmra.mrb[0].mxu0 %v376
    %v1656 = vpop.f32.mrb[0].mxu0
    %v1657 = vadd.f32 0.0, %v1656
    %v1658 = vpop.f32.mrb[0].mxu0
    %1659 = vmatprep.mubr.f32.mxu0 0.0
    %1660 = vmatmul.mubr.f32.gmra.mrb[0].mxu0 %v379
    %v1661 = vpop.f32.mrb[0].mxu0
    %v1662 = vadd.f32 0.0, %v1661
    %v1663 = vpop.f32.mrb[0].mxu0
    %1664 = vdwg.mxu0
    %v1665 = vadd.f32 %v1647, %v1652
    %v1666 = vadd.f32 %v1665, %v1657
    %v1667 = vadd.f32 %v1666, %v1662
    %v1668 = vrot.slane %v1667, 4
    %v1669 = vadd.f32 %v1667, %v1668
    %v1670 = vrot.slane %v1669, 2
    %v1671 = vadd.f32 %v1669, %v1670
    %v1672 = vrot.slane %v1671, 1
    %v1673 = vadd.f32 %v1671, %v1672
    %v1674 = vmul.f32 %v1647, %v1647
    %v1675 = vmul.f32 %v1652, %v1652
    %v1676 = vmul.f32 %v1657, %v1657
    %v1677 = vmul.f32 %v1662, %v1662
    %v1678 = vadd.f32 %v1674, %v1675
    %v1679 = vadd.f32 %v1678, %v1676
    %v1680 = vadd.f32 %v1679, %v1677
    %v1681 = vrot.slane %v1680, 4
    %v1682 = vadd.f32 %v1680, %v1681
    %v1683 = vrot.slane %v1682, 2
    %v1684 = vadd.f32 %v1682, %v1683
    %v1685 = vrot.slane %v1684, 1
    %v1686 = vadd.f32 %v1684, %v1685
    %1687 = vmatprep.subr.mxu0 0.0
    %1688 = vmatpush1.msra.mxu0 %v140
    %1689 = vmatprep.subr.mxu0 0.0
    %1690 = vmatpush1.msra.mxu0 %v141
    %1691 = vmatprep.subr.mxu0 0.0
    %1692 = vmatpush1.msra.mxu0 %v142
    %1693 = vmatprep.subr.mxu0 0.0
    %1694 = vmatpush1.msra.mxu0 %v143
    %1695 = vmatprep.subr.mxu0 0.0
    %1696 = vmatpush1.msra.mxu0 %v144
    %1697 = vmatprep.subr.mxu0 0.0
    %1698 = vmatpush1.msra.mxu0 %v145
    %1699 = vmatprep.subr.mxu0 0.0
    %1700 = vmatpush1.msra.mxu0 %v146
    %1701 = vmatprep.subr.mxu0 0.0
    %1702 = vmatpush1.msra.mxu0 %v147
    %1703 = vmatprep.subr.mxu0 0.0
    %1704 = vmatpush1.msra.mxu0 %v148
    %1705 = vmatprep.subr.mxu0 0.0
    %1706 = vmatpush1.msra.mxu0 %v149
    %1707 = vmatprep.subr.mxu0 0.0
    %1708 = vmatpush1.msra.mxu0 %v150
    %1709 = vmatprep.subr.mxu0 0.0
    %1710 = vmatpush1.msra.mxu0 %v151
    %1711 = vmatprep.subr.mxu0 0.0
    %1712 = vmatpush1.msra.mxu0 %v152
    %1713 = vmatprep.subr.mxu0 0.0
    %1714 = vmatpush1.msra.mxu0 %v153
    %1715 = vmatprep.subr.mxu0 0.0
    %1716 = vmatpush1.msra.mxu0 %v154
    %1717 = vmatprep.subr.mxu0 0.0
    %1718 = vmatpush1.msra.mxu0 %v155
    %1719 = vmatprep.subr.mxu0 0.0
    %1720 = vmatpush1.msra.mxu0 0.0
    %1721 = vmatprep.subr.mxu0 0.0
    %1722 = vmatpush1.msra.mxu0 0.0
    %1723 = vmatprep.subr.mxu0 0.0
    %1724 = vmatpush1.msra.mxu0 0.0
    %1725 = vmatprep.subr.mxu0 0.0
    %1726 = vmatpush1.msra.mxu0 0.0
    %1727 = vmatprep.subr.mxu0 0.0
    %1728 = vmatpush1.msra.mxu0 0.0
    %1729 = vmatprep.subr.mxu0 0.0
    %1730 = vmatpush1.msra.mxu0 0.0
    %1731 = vmatprep.subr.mxu0 0.0
    %1732 = vmatpush1.msra.mxu0 0.0
    %1733 = vmatprep.subr.mxu0 0.0
    %1734 = vmatpush1.msra.mxu0 0.0
    %1735 = vmatprep.subr.mxu0 0.0
    %1736 = vmatpush1.msra.mxu0 0.0
    %1737 = vmatprep.subr.mxu0 0.0
    %1738 = vmatpush1.msra.mxu0 0.0
    %1739 = vmatprep.subr.mxu0 0.0
    %1740 = vmatpush1.msra.mxu0 0.0
    %1741 = vmatprep.subr.mxu0 0.0
    %1742 = vmatpush1.msra.mxu0 0.0
    %1743 = vmatprep.subr.mxu0 0.0
    %1744 = vmatpush1.msra.mxu0 0.0
    %1745 = vmatprep.subr.mxu0 0.0
    %1746 = vmatpush1.msra.mxu0 0.0
    %1747 = vmatprep.subr.mxu0 0.0
    %1748 = vmatpush1.msra.mxu0 0.0
    %1749 = vmatprep.subr.mxu0 0.0
    %1750 = vmatpush1.msra.mxu0 0.0
    %1751 = vmatprep.mubr.f32.mxu0 0.0
    %1752 = vmatmul.mubr.f32.gmra.mrb[0].mxu0 %v1673
    %v1753 = vpop.f32.mrb[0].mxu0
    %v1754 = vadd.f32 0.0, %v1753
    %v1755 = vpop.f32.mrb[0].mxu0
    %1756 = vdwg.mxu0
    %v1757 = vmul.f32 %v1754, 0.001953125
    %1758 = vmatprep.subr.mxu0 0.0
    %1759 = vmatpush1.msra.mxu0 %v140
    %1760 = vmatprep.subr.mxu0 0.0
    %1761 = vmatpush1.msra.mxu0 %v141
    %1762 = vmatprep.subr.mxu0 0.0
    %1763 = vmatpush1.msra.mxu0 %v142
    %1764 = vmatprep.subr.mxu0 0.0
    %1765 = vmatpush1.msra.mxu0 %v143
    %1766 = vmatprep.subr.mxu0 0.0
    %1767 = vmatpush1.msra.mxu0 %v144
    %1768 = vmatprep.subr.mxu0 0.0
    %1769 = vmatpush1.msra.mxu0 %v145
    %1770 = vmatprep.subr.mxu0 0.0
    %1771 = vmatpush1.msra.mxu0 %v146
    %1772 = vmatprep.subr.mxu0 0.0
    %1773 = vmatpush1.msra.mxu0 %v147
    %1774 = vmatprep.subr.mxu0 0.0
    %1775 = vmatpush1.msra.mxu0 %v148
    %1776 = vmatprep.subr.mxu0 0.0
    %1777 = vmatpush1.msra.mxu0 %v149
    %1778 = vmatprep.subr.mxu0 0.0
    %1779 = vmatpush1.msra.mxu0 %v150
    %1780 = vmatprep.subr.mxu0 0.0
    %1781 = vmatpush1.msra.mxu0 %v151
    %1782 = vmatprep.subr.mxu0 0.0
    %1783 = vmatpush1.msra.mxu0 %v152
    %1784 = vmatprep.subr.mxu0 0.0
    %1785 = vmatpush1.msra.mxu0 %v153
    %1786 = vmatprep.subr.mxu0 0.0
    %1787 = vmatpush1.msra.mxu0 %v154
    %1788 = vmatprep.subr.mxu0 0.0
    %1789 = vmatpush1.msra.mxu0 %v155
    %1790 = vmatprep.subr.mxu0 0.0
    %1791 = vmatpush1.msra.mxu0 0.0
    %1792 = vmatprep.subr.mxu0 0.0
    %1793 = vmatpush1.msra.mxu0 0.0
    %1794 = vmatprep.subr.mxu0 0.0
    %1795 = vmatpush1.msra.mxu0 0.0
    %1796 = vmatprep.subr.mxu0 0.0
    %1797 = vmatpush1.msra.mxu0 0.0
    %1798 = vmatprep.subr.mxu0 0.0
    %1799 = vmatpush1.msra.mxu0 0.0
    %1800 = vmatprep.subr.mxu0 0.0
    %1801 = vmatpush1.msra.mxu0 0.0
    %1802 = vmatprep.subr.mxu0 0.0
    %1803 = vmatpush1.msra.mxu0 0.0
    %1804 = vmatprep.subr.mxu0 0.0
    %1805 = vmatpush1.msra.mxu0 0.0
    %1806 = vmatprep.subr.mxu0 0.0
    %1807 = vmatpush1.msra.mxu0 0.0
    %1808 = vmatprep.subr.mxu0 0.0
    %1809 = vmatpush1.msra.mxu0 0.0
    %1810 = vmatprep.subr.mxu0 0.0
    %1811 = vmatpush1.msra.mxu0 0.0
    %1812 = vmatprep.subr.mxu0 0.0
    %1813 = vmatpush1.msra.mxu0 0.0
    %1814 = vmatprep.subr.mxu0 0.0
    %1815 = vmatpush1.msra.mxu0 0.0
    %1816 = vmatprep.subr.mxu0 0.0
    %1817 = vmatpush1.msra.mxu0 0.0
    %1818 = vmatprep.subr.mxu0 0.0
    %1819 = vmatpush1.msra.mxu0 0.0
    %1820 = vmatprep.subr.mxu0 0.0
    %1821 = vmatpush1.msra.mxu0 0.0
    %1822 = vmatprep.mubr.f32.mxu0 0.0
    %1823 = vmatmul.mubr.f32.gmra.mrb[0].mxu0 %v1686
    %v1824 = vpop.f32.mrb[0].mxu0
    %v1825 = vadd.f32 0.0, %v1824
    %v1826 = vpop.f32.mrb[0].mxu0
    %1827 = vdwg.mxu0
    %v1828 = vmul.f32 %v1825, 0.001953125
    %v1829 = vmul.f32 %v1757, %v1757
    %v1830 = vsub.f32 %v1828, %v1829
    %v1831 = vmax.f32 %v1830, 0.0
    %v1832 = vld [vmem:[%s7 + $0x2] sm:$0x1]
    %v1833 = vadd.f32 %v1831, 1e-05
    %v1834 = vrsqrt.pop %v1833
    %v1835 = vmul.f32 %v1832, %v1834
    %v1836 = vld [vmem:[%s8 + $0x2] sm:$0x1]
    %v1837 = vmul.f32 %v1757, %v1835
    %v1838 = vsub.f32 %v1836, %v1837
    %v1839 = vlaneseq
    %v1840 = vshrl.u32 %v1839, 7
    %v1841 = vsub.s32 0, %v1840
    %v1842 = vrot.slane %v1835, %v1841
    %v1843 = vmul.f32 %v1647, %v1842
    %v1844 = vmul.f32 %v1652, %v1842
    %v1845 = vmul.f32 %v1657, %v1842
    %v1846 = vmul.f32 %v1662, %v1842
    %v1847 = vlaneseq
    %v1848 = vshrl.u32 %v1847, 7
    %v1849 = vsub.s32 0, %v1848
    %v1850 = vrot.slane %v1838, %v1849
    %v1851 = vadd.f32 %v1843, %v1850
    %v1852 = vadd.f32 %v1844, %v1850
    %v1853 = vadd.f32 %v1845, %v1850
    %v1854 = vadd.f32 %v1846, %v1850
    %v1855 = vadd.f32 %v1568, %v1851
    %v1856 = vadd.f32 %v1569, %v1852
    %v1857 = vadd.f32 %v1570, %v1853
    %v1858 = vadd.f32 %v1571, %v1854
    %v1859 = vadd.f32 %v1855, %v1856
    %v1860 = vadd.f32 %v1859, %v1857
    %v1861 = vadd.f32 %v1860, %v1858
    %v1862 = vrot.slane %v1861, 4
    %v1863 = vadd.f32 %v1861, %v1862
    %v1864 = vrot.slane %v1863, 2
    %v1865 = vadd.f32 %v1863, %v1864
    %v1866 = vrot.slane %v1865, 1
    %v1867 = vadd.f32 %v1865, %v1866
    %v1868 = vmul.f32 %v1855, %v1855
    %v1869 = vmul.f32 %v1856, %v1856
    %v1870 = vmul.f32 %v1857, %v1857
    %v1871 = vmul.f32 %v1858, %v1858
    %v1872 = vadd.f32 %v1868, %v1869
    %v1873 = vadd.f32 %v1872, %v1870
    %v1874 = vadd.f32 %v1873, %v1871
    %v1875 = vrot.slane %v1874, 4
    %v1876 = vadd.f32 %v1874, %v1875
    %v1877 = vrot.slane %v1876, 2
    %v1878 = vadd.f32 %v1876, %v1877
    %v1879 = vrot.slane %v1878, 1
    %v1880 = vadd.f32 %v1878, %v1879
    %1881 = vmatprep.subr.mxu0 0.0
    %1882 = vmatpush1.msra.mxu0 %v140
    %1883 = vmatprep.subr.mxu0 0.0
    %1884 = vmatpush1.msra.mxu0 %v141
    %1885 = vmatprep.subr.mxu0 0.0
    %1886 = vmatpush1.msra.mxu0 %v142
    %1887 = vmatprep.subr.mxu0 0.0
    %1888 = vmatpush1.msra.mxu0 %v143
    %1889 = vmatprep.subr.mxu0 0.0
    %1890 = vmatpush1.msra.mxu0 %v144
    %1891 = vmatprep.subr.mxu0 0.0
    %1892 = vmatpush1.msra.mxu0 %v145
    %1893 = vmatprep.subr.mxu0 0.0
    %1894 = vmatpush1.msra.mxu0 %v146
    %1895 = vmatprep.subr.mxu0 0.0
    %1896 = vmatpush1.msra.mxu0 %v147
    %1897 = vmatprep.subr.mxu0 0.0
    %1898 = vmatpush1.msra.mxu0 %v148
    %1899 = vmatprep.subr.mxu0 0.0
    %1900 = vmatpush1.msra.mxu0 %v149
    %1901 = vmatprep.subr.mxu0 0.0
    %1902 = vmatpush1.msra.mxu0 %v150
    %1903 = vmatprep.subr.mxu0 0.0
    %1904 = vmatpush1.msra.mxu0 %v151
    %1905 = vmatprep.subr.mxu0 0.0
    %1906 = vmatpush1.msra.mxu0 %v152
    %1907 = vmatprep.subr.mxu0 0.0
    %1908 = vmatpush1.msra.mxu0 %v153
    %1909 = vmatprep.subr.mxu0 0.0
    %1910 = vmatpush1.msra.mxu0 %v154
    %1911 = vmatprep.subr.mxu0 0.0
    %1912 = vmatpush1.msra.mxu0 %v155
    %1913 = vmatprep.subr.mxu0 0.0
    %1914 = vmatpush1.msra.mxu0 0.0
    %1915 = vmatprep.subr.mxu0 0.0
    %1916 = vmatpush1.msra.mxu0 0.0
    %1917 = vmatprep.subr.mxu0 0.0
    %1918 = vmatpush1.msra.mxu0 0.0
    %1919 = vmatprep.subr.mxu0 0.0
    %1920 = vmatpush1.msra.mxu0 0.0
    %1921 = vmatprep.subr.mxu0 0.0
    %1922 = vmatpush1.msra.mxu0 0.0
    %1923 = vmatprep.subr.mxu0 0.0
    %1924 = vmatpush1.msra.mxu0 0.0
    %1925 = vmatprep.subr.mxu0 0.0
    %1926 = vmatpush1.msra.mxu0 0.0
    %1927 = vmatprep.subr.mxu0 0.0
    %1928 = vmatpush1.msra.mxu0 0.0
    %1929 = vmatprep.subr.mxu0 0.0
    %1930 = vmatpush1.msra.mxu0 0.0
    %1931 = vmatprep.subr.mxu0 0.0
    %1932 = vmatpush1.msra.mxu0 0.0
    %1933 = vmatprep.subr.mxu0 0.0
    %1934 = vmatpush1.msra.mxu0 0.0
    %1935 = vmatprep.subr.mxu0 0.0
    %1936 = vmatpush1.msra.mxu0 0.0
    %1937 = vmatprep.subr.mxu0 0.0
    %1938 = vmatpush1.msra.mxu0 0.0
    %1939 = vmatprep.subr.mxu0 0.0
    %1940 = vmatpush1.msra.mxu0 0.0
    %1941 = vmatprep.subr.mxu0 0.0
    %1942 = vmatpush1.msra.mxu0 0.0
    %1943 = vmatprep.subr.mxu0 0.0
    %1944 = vmatpush1.msra.mxu0 0.0
    %1945 = vmatprep.mubr.f32.mxu0 0.0
    %1946 = vmatmul.mubr.f32.gmra.mrb[0].mxu0 %v1867
    %v1947 = vpop.f32.mrb[0].mxu0
    %v1948 = vadd.f32 0.0, %v1947
    %v1949 = vpop.f32.mrb[0].mxu0
    %1950 = vdwg.mxu0
    %v1951 = vmul.f32 %v1948, 0.001953125
    %1952 = vmatprep.subr.mxu0 0.0
    %1953 = vmatpush1.msra.mxu0 %v140
    %1954 = vmatprep.subr.mxu0 0.0
    %1955 = vmatpush1.msra.mxu0 %v141
    %1956 = vmatprep.subr.mxu0 0.0
    %1957 = vmatpush1.msra.mxu0 %v142
    %1958 = vmatprep.subr.mxu0 0.0
    %1959 = vmatpush1.msra.mxu0 %v143
    %1960 = vmatprep.subr.mxu0 0.0
    %1961 = vmatpush1.msra.mxu0 %v144
    %1962 = vmatprep.subr.mxu0 0.0
    %1963 = vmatpush1.msra.mxu0 %v145
    %1964 = vmatprep.subr.mxu0 0.0
    %1965 = vmatpush1.msra.mxu0 %v146
    %1966 = vmatprep.subr.mxu0 0.0
    %1967 = vmatpush1.msra.mxu0 %v147
    %1968 = vmatprep.subr.mxu0 0.0
    %1969 = vmatpush1.msra.mxu0 %v148
    %1970 = vmatprep.subr.mxu0 0.0
    %1971 = vmatpush1.msra.mxu0 %v149
    %1972 = vmatprep.subr.mxu0 0.0
    %1973 = vmatpush1.msra.mxu0 %v150
    %1974 = vmatprep.subr.mxu0 0.0
    %1975 = vmatpush1.msra.mxu0 %v151
    %1976 = vmatprep.subr.mxu0 0.0
    %1977 = vmatpush1.msra.mxu0 %v152
    %1978 = vmatprep.subr.mxu0 0.0
    %1979 = vmatpush1.msra.mxu0 %v153
    %1980 = vmatprep.subr.mxu0 0.0
    %1981 = vmatpush1.msra.mxu0 %v154
    %1982 = vmatprep.subr.mxu0 0.0
    %1983 = vmatpush1.msra.mxu0 %v155
    %1984 = vmatprep.subr.mxu0 0.0
    %1985 = vmatpush1.msra.mxu0 0.0
    %1986 = vmatprep.subr.mxu0 0.0
    %1987 = vmatpush1.msra.mxu0 0.0
    %1988 = vmatprep.subr.mxu0 0.0
    %1989 = vmatpush1.msra.mxu0 0.0
    %1990 = vmatprep.subr.mxu0 0.0
    %1991 = vmatpush1.msra.mxu0 0.0
    %1992 = vmatprep.subr.mxu0 0.0
    %1993 = vmatpush1.msra.mxu0 0.0
    %1994 = vmatprep.subr.mxu0 0.0
    %1995 = vmatpush1.msra.mxu0 0.0
    %1996 = vmatprep.subr.mxu0 0.0
    %1997 = vmatpush1.msra.mxu0 0.0
    %1998 = vmatprep.subr.mxu0 0.0
    %1999 = vmatpush1.msra.mxu0 0.0
    %2000 = vmatprep.subr.mxu0 0.0
    %2001 = vmatpush1.msra.mxu0 0.0
    %2002 = vmatprep.subr.mxu0 0.0
    %2003 = vmatpush1.msra.mxu0 0.0
    %2004 = vmatprep.subr.mxu0 0.0
    %2005 = vmatpush1.msra.mxu0 0.0
    %2006 = vmatprep.subr.mxu0 0.0
    %2007 = vmatpush1.msra.mxu0 0.0
    %2008 = vmatprep.subr.mxu0 0.0
    %2009 = vmatpush1.msra.mxu0 0.0
    %2010 = vmatprep.subr.mxu0 0.0
    %2011 = vmatpush1.msra.mxu0 0.0
    %2012 = vmatprep.subr.mxu0 0.0
    %2013 = vmatpush1.msra.mxu0 0.0
    %2014 = vmatprep.subr.mxu0 0.0
    %2015 = vmatpush1.msra.mxu0 0.0
    %2016 = vmatprep.mubr.f32.mxu0 0.0
    %2017 = vmatmul.mubr.f32.gmra.mrb[0].mxu0 %v1880
    %v2018 = vpop.f32.mrb[0].mxu0
    %v2019 = vadd.f32 0.0, %v2018
    %v2020 = vpop.f32.mrb[0].mxu0
    %2021 = vdwg.mxu0
    %v2022 = vmul.f32 %v2019, 0.001953125
    %v2023 = vmul.f32 %v1951, %v1951
    %v2024 = vsub.f32 %v2022, %v2023
    %v2025 = vmax.f32 %v2024, 0.0
    %v2026 = vld [vmem:[%s7 + $0x3] sm:$0x1]
    %v2027 = vadd.f32 %v2025, 1e-05
    %v2028 = vrsqrt.pop %v2027
    %v2029 = vmul.f32 %v2026, %v2028
    %v2030 = vld [vmem:[%s8 + $0x3] sm:$0x1]
    %v2031 = vmul.f32 %v1951, %v2029
    %v2032 = vsub.f32 %v2030, %v2031
    %v2033 = vlaneseq
    %v2034 = vshrl.u32 %v2033, 7
    %v2035 = vsub.s32 0, %v2034
    %v2036 = vrot.slane %v2029, %v2035
    %v2037 = vmul.f32 %v1855, %v2036
    %v2038 = vmul.f32 %v1856, %v2036
    %v2039 = vmul.f32 %v1857, %v2036
    %v2040 = vmul.f32 %v1858, %v2036
    %v2041 = vlaneseq
    %v2042 = vshrl.u32 %v2041, 7
    %v2043 = vsub.s32 0, %v2042
    %v2044 = vrot.slane %v2032, %v2043
    %v2045 = vadd.f32 %v2037, %v2044
    %v2046 = vadd.f32 %v2038, %v2044
    %v2047 = vadd.f32 %v2039, %v2044
    %v2048 = vadd.f32 %v2040, %v2044
    %2049 = vst [vmem:[#allocation14] sm:$0xff] %v2045
    %2050 = vst [vmem:[#allocation14 + $0x8] sm:$0xff] %v2046
    %2051 = vst [vmem:[#allocation14 + $0x10] sm:$0xff] %v2047
    %2052 = vst [vmem:[#allocation14 + $0x18] sm:$0xff] %v2048
    // Predicated region
    $region66: #{tpu_custom_call.1} parent=1 // pred_check
      _
    $region67: #{tpu_custom_call.1} parent=1 // pred_check_branch
      %2054 = sbr.rel (0) target = $region69
    $region68: #{tpu_custom_call.1} parent=1 // pred_region
      %s2056 = ssub.s32 512, 512
      %2057 = vsyncadd [#allocation4], %s2056
      %s2058 = sshll.u32 [#allocation14], 4
      %s2059 = int_to_ptr.vmem [resolvable:$true] %s2058
      %2064 = dma.vmem_to_hbm [thread:$0]  %s2059, 512, %s9, [#allocation4], 128, 128, 8
    $region69: #{tpu_custom_call.1} parent=1 // pred_fallthru
      _
    // Predicated region
    $region70: #{tpu_custom_call.1} parent=1 // pred_check
      _
    $region71: #{tpu_custom_call.1} parent=1 // pred_check_branch
      %2066 = sbr.rel (0) target = $region73
    $region72: #{tpu_custom_call.1} parent=1 // pred_region
      %2067 = dma.done [#allocation4], 512
    $region73: #{tpu_custom_call.1} parent=1 // pred_fallthru
      _
    %2068 = vsyncpa [#allocation3], 1
    %2069 = vsyncpa [#allocation6], 1
    %2070 = vsyncpa [#allocation9], 1
    %2071 = vsyncpa [#allocation12], 1
    %2072 = vsyncpa [#allocation4], 1

</llo_original>
